<compile_context>
chip_gen: v5e
topology: v5e:2x2
jax: 0.10.0
libtpu: 0.0.40
codegen_flags: <defaults>
</compile_context>

<pallas_src>
import functools

import jax
import jax.numpy as jnp
from jax import lax
from jax.experimental import pallas as pl
from jax.experimental.pallas import tpu as pltpu


def _cdiv(a, b):
    return -(-a // b)


def _round_up(a, b):
    return _cdiv(a, b) * b


def _vmem_budget():
    """(scoped vmem limit, planning budget) in bytes, per chip generation."""
    phys = 64 * 1024 * 1024  # conservative fallback: v7x-sized VMEM
    try:
        phys = int(pltpu.get_tpu_info().vmem_capacity_bytes)
    except Exception:
        pass
    # v5e/v6e (128 MiB physical) -> 64 MiB scoped limit; v7x (64 MiB) -> 32 MiB.
    limit = min(max(phys // 2, 32 * 1024 * 1024), 64 * 1024 * 1024)
    return limit, (limit * 3) // 4


def _pick_tiles(N, D, M, in_bytes, cmp_bytes, m_tile, budget):
    """Pick (Nt, Mt) so the double-buffered native-dtype input block plus the
    per-row compute intermediates fit the VMEM planning budget."""
    m_tile = max(128, _round_up(m_tile, 128))
    mt = M if M <= 128 else min(m_tile, _round_up(M, 128))
    nt = min(N, 8)

    def vmem_bytes(nt_, mt_):
        in_blk = nt_ * D * mt_ * in_bytes      # input block, native dtype
        out_blk = nt_ * mt_ * in_bytes         # output block
        row_work = 3 * D * mt_ * cmp_bytes     # x_n cast + e (+ slack), one row live
        w_blk = 8 * max(D, 128) * 4            # (2, D) weights, tile-padded
        return 2 * in_blk + 2 * out_blk + row_work + w_blk

    # Shrink Nt before Mt (output rows are only ~1/D of the traffic; Mt sets
    # the contiguous HBM run length), and never push Mt below 512.
    while vmem_bytes(nt, mt) > budget and nt > 1:
        nt = max(1, nt // 2)
    while vmem_bytes(nt, mt) > budget and mt > 512:
        mt = max(512, _round_up(mt // 2, 128))

    # Make sure there are >= 2 blocks so both v7x TensorCores get work.
    if _cdiv(N, nt) * _cdiv(M, mt) < 2:
        if N >= 2:
            nt = _cdiv(N, 2)
        elif M > 128:
            mt = _round_up(_cdiv(M, 2), 128)
    return nt, mt


def _disparity_regression_kernel(x_ref, w_ref, o_ref, *, nt, bf16_compute):
    # x_ref: (Nt, D, Mt) input block (native dtype)
    # w_ref: (2, D) f32, row 0 = ones (denominator), row 1 = disparity indices
    #        (numerator); constant index_map -> VMEM resident.
    # o_ref: (Nt, 1, Mt) output block
    cdt = jnp.bfloat16 if bf16_compute else jnp.float32
    w = w_ref[...].astype(cdt)                      # hoisted once per block

    for n in range(nt):                             # static unroll, nt <= 8
        x = x_ref[n].astype(cdt)                    # (D, Mt)
        m = jnp.max(x, axis=0, keepdims=True)       # (1, Mt)  XLU sublane reduce
        e = jnp.exp(x - m)                          # (D, Mt)  VPU + EUP
        # Fused denominator/numerator on the MXU, f32 accumulation.
        if bf16_compute:
            r = jnp.dot(w, e, preferred_element_type=jnp.float32)        # (2, Mt)
        else:
            r = jnp.dot(w, e, preferred_element_type=jnp.float32,
                        precision=lax.Precision.HIGHEST)                 # (2, Mt)
        # Exact divide (approx reciprocal previously broke the f32 tolerance).
        o_ref[n] = (r[1:2, :] / r[0:1, :]).astype(o_ref.dtype)


@functools.partial(jax.jit, static_argnames=("m_tile", "prefer_native_compute"))
def disparity_regression(x, idx, *, m_tile=1024, prefer_native_compute=True):
    """x: (B, C, D, H, W); idx: (D,) float disparity weights -> (B, C, H, W)."""
    B, C, D, H, W = x.shape
    N, M = B * C, H * W

    x3 = x.reshape(N, D, M)                         # pure view, no HBM copy
    # Fused-reduction weights: row 0 -> softmax denominator, row 1 -> numerator.
    w2 = jnp.stack(
        [jnp.ones((D,), jnp.float32), idx.reshape(D).astype(jnp.float32)],
        axis=0)                                     # (2, D)

    # bf16 inputs: keep max/sub/exp in bf16 (v6e/v7x bf16 VPU/EUP); pass
    # prefer_native_compute=False to force f32 compute (e.g. on v5e).
    bf16_compute = bool(prefer_native_compute) and x.dtype == jnp.bfloat16
    cmp_bytes = 2 if bf16_compute else 4

    vmem_limit, budget = _vmem_budget()
    nt, mt = _pick_tiles(N, D, M, x.dtype.itemsize, cmp_bytes, m_tile, budget)
    grid = (_cdiv(N, nt), _cdiv(M, mt))

    kernel = functools.partial(
        _disparity_regression_kernel, nt=nt, bf16_compute=bf16_compute)

    out = pl.pallas_call(
        kernel,
        out_shape=jax.ShapeDtypeStruct((N, 1, M), x.dtype),
        grid_spec=pl.GridSpec(
            grid=grid,
            in_specs=[
                pl.BlockSpec((nt, D, mt), lambda n, m: (n, 0, m)),
                pl.BlockSpec((2, D), lambda n, m: (0, 0)),
            ],
            out_specs=pl.BlockSpec((nt, 1, mt), lambda n, m: (n, 0, m)),
        ),
        compiler_params=pltpu.CompilerParams(
            dimension_semantics=("parallel", "parallel"),
            vmem_limit_bytes=vmem_limit,
        ),
    )(x3, w2)

    return out.reshape(B, C, H, W)


def disparity_regression_ref(x, idx):
    p = jax.nn.softmax(x.astype(jnp.float32), axis=2)
    return jnp.tensordot(p, idx.astype(jnp.float32), axes=([2], [0]))


if __name__ == "__main__":
    key = jax.random.PRNGKey(0)
    k1, k2, k3 = jax.random.split(key, 3)

    # Case 1: aligned shapes, N = B*C = 8, f32 input.  idx = arange(D)
    # (trainable=False; the trainable=True parameter has the same shape and
    # reaches the same kernel path).
    B, C, D, H, W = 2, 4, 16, 16, 16
    x1 = jax.random.normal(k1, (B, C, D, H, W), dtype=jnp.float32)
    idx1 = jnp.arange(D, dtype=jnp.float32)
    out1 = jax.block_until_ready(disparity_regression(x1, idx1))
    ref1 = disparity_regression_ref(x1, idx1)
    assert out1.shape == (B, C, H, W), out1.shape
    assert jnp.allclose(out1, ref1, atol=2e-3, rtol=2e-3), float(
        jnp.max(jnp.abs(out1 - ref1)))

    # Case 2: ragged spatial size (M = 10*13 = 130, not a multiple of 128) and
    # N = 3 -> partial edge blocks on both grid axes, no host-side pad/slice.
    B, C, D, H, W = 1, 3, 24, 10, 13
    x2 = jax.random.normal(k2, (B, C, D, H, W), dtype=jnp.float32)
    idx2 = jnp.arange(D, dtype=jnp.float32)
    out2 = jax.block_until_ready(disparity_regression(x2, idx2))
    ref2 = disparity_regression_ref(x2, idx2)
    assert out2.shape == (B, C, H, W), out2.shape
    assert jnp.allclose(out2, ref2, atol=2e-3, rtol=2e-3), float(
        jnp.max(jnp.abs(out2 - ref2)))

    # Case 3: bf16 input -> native bf16 max/sub/exp + bf16 MXU with f32
    # accumulation.  Tolerance is intentionally loose: the softmax weights are
    # rounded to bf16 (~0.2-1% each) and the output itself is bf16 (ulp ~0.125
    # at values ~16-31); this still catches any indexing/normalization bug,
    # which would be off by whole disparity units.
    B, C, D, H, W = 1, 2, 32, 8, 24
    x3 = jax.random.normal(k3, (B, C, D, H, W), dtype=jnp.float32).astype(
        jnp.bfloat16)
    idx3 = jnp.arange(D, dtype=jnp.float32)
    out3 = jax.block_until_ready(disparity_regression(x3, idx3))
    ref3 = disparity_regression_ref(x3, idx3)
    assert out3.shape == (B, C, H, W), out3.shape
    err3 = jnp.max(jnp.abs(out3.astype(jnp.float32) - ref3))
    assert jnp.allclose(out3.astype(jnp.float32), ref3, atol=0.5, rtol=5e-2), float(err3)

    print("KERNEL_OK")
</pallas_src>

<mosaic_0001>
module attributes {stable_mosaic.version = 11 : i64} {
  func.func @_disparity_regression_kernel(%arg0: i32, %arg1: i32, %arg2: memref<4x16x256xf32, #tpu.memory_space<vmem>>, %arg3: memref<2x16xf32, #tpu.memory_space<vmem>>, %arg4: memref<4x1x256xf32, #tpu.memory_space<vmem>>) attributes {dimension_semantics = [#tpu.dimension_semantics<parallel>, #tpu.dimension_semantics<parallel>], iteration_bounds = array<i64: 2, 1>, scalar_prefetch = 0 : i64, scratch_operands = 0 : i64, tpu.core_type = #tpu.core_type<tc>, window_params = [{transform_indices = @transform_0, window_bounds = array<i64: 4, 16, 256>}, {pipeline_mode = #tpu.pipeline_mode<synchronous>, transform_indices = @transform_1, window_bounds = array<i64: 2, 16>}, {transform_indices = @transform_2, window_bounds = array<i64: 4, 1, 256>}]} {
    %c0 = arith.constant 0 : index
    %c0_0 = arith.constant 0 : index
    %0 = vector.load %arg3[%c0, %c0_0] : memref<2x16xf32, #tpu.memory_space<vmem>>, vector<2x16xf32>
    %c0_1 = arith.constant 0 : index
    %c0_2 = arith.constant 0 : index
    %c0_3 = arith.constant 0 : index
    %1 = vector.load %arg2[%c0_1, %c0_2, %c0_3] : memref<4x16x256xf32, #tpu.memory_space<vmem>>, vector<1x16x256xf32>
    %2 = vector.shape_cast %1 : vector<1x16x256xf32> to vector<16x256xf32>
    %cst = arith.constant dense<0xFF800000> : vector<256xf32>
    %3 = vector.multi_reduction <maximumf>, %2, %cst [0] : vector<16x256xf32> to vector<256xf32>
    %4 = vector.shape_cast %3 : vector<256xf32> to vector<1x256xf32>
    %5 = vector.broadcast %4 : vector<1x256xf32> to vector<16x256xf32>
    %6 = arith.subf %2, %5 : vector<16x256xf32>
    %7 = math.exp %6 : vector<16x256xf32>
    %cst_4 = arith.constant dense<0.000000e+00> : vector<2x256xf32>
    %8 = tpu.matmul %0, %7, %cst_4 {dimension_numbers = #tpu.dot_dimension_numbers<[1], [0], [0], [1], [0, 0, 1, 1], [], []>, precision = #tpu.contract_precision<fp32>} : vector<2x16xf32>, vector<16x256xf32>, vector<2x256xf32> -> vector<2x256xf32>
    %9 = vector.extract_strided_slice %8 {offsets = [1, 0], sizes = [1, 256], strides = [1, 1]} : vector<2x256xf32> to vector<1x256xf32>
    %10 = vector.extract_strided_slice %8 {offsets = [0, 0], sizes = [1, 256], strides = [1, 1]} : vector<2x256xf32> to vector<1x256xf32>
    %11 = arith.divf %9, %10 : vector<1x256xf32>
    %c0_5 = arith.constant 0 : index
    %c0_6 = arith.constant 0 : index
    %c0_7 = arith.constant 0 : index
    %12 = vector.load %arg4[%c0_5, %c0_6, %c0_7] : memref<4x1x256xf32, #tpu.memory_space<vmem>>, vector<1x1x256xf32>
    %13 = vector.shape_cast %12 : vector<1x1x256xf32> to vector<1x256xf32>
    %14 = vector.shape_cast %11 : vector<1x256xf32> to vector<1x1x256xf32>
    tpu.vector_store %arg4[%c0_5, %c0_6, %c0_7], %14 {strides = array<i32>} : memref<4x1x256xf32, #tpu.memory_space<vmem>>, vector<1x1x256xf32>,
    %c1 = arith.constant 1 : index
    %c0_8 = arith.constant 0 : index
    %c0_9 = arith.constant 0 : index
    %15 = vector.load %arg2[%c1, %c0_8, %c0_9] : memref<4x16x256xf32, #tpu.memory_space<vmem>>, vector<1x16x256xf32>
    %16 = vector.shape_cast %15 : vector<1x16x256xf32> to vector<16x256xf32>
    %cst_10 = arith.constant dense<0xFF800000> : vector<256xf32>
    %17 = vector.multi_reduction <maximumf>, %16, %cst_10 [0] : vector<16x256xf32> to vector<256xf32>
    %18 = vector.shape_cast %17 : vector<256xf32> to vector<1x256xf32>
    %19 = vector.broadcast %18 : vector<1x256xf32> to vector<16x256xf32>
    %20 = arith.subf %16, %19 : vector<16x256xf32>
    %21 = math.exp %20 : vector<16x256xf32>
    %cst_11 = arith.constant dense<0.000000e+00> : vector<2x256xf32>
    %22 = tpu.matmul %0, %21, %cst_11 {dimension_numbers = #tpu.dot_dimension_numbers<[1], [0], [0], [1], [0, 0, 1, 1], [], []>, precision = #tpu.contract_precision<fp32>} : vector<2x16xf32>, vector<16x256xf32>, vector<2x256xf32> -> vector<2x256xf32>
    %23 = vector.extract_strided_slice %22 {offsets = [1, 0], sizes = [1, 256], strides = [1, 1]} : vector<2x256xf32> to vector<1x256xf32>
    %24 = vector.extract_strided_slice %22 {offsets = [0, 0], sizes = [1, 256], strides = [1, 1]} : vector<2x256xf32> to vector<1x256xf32>
    %25 = arith.divf %23, %24 : vector<1x256xf32>
    %c1_12 = arith.constant 1 : index
    %c0_13 = arith.constant 0 : index
    %c0_14 = arith.constant 0 : index
    %26 = vector.load %arg4[%c1_12, %c0_13, %c0_14] : memref<4x1x256xf32, #tpu.memory_space<vmem>>, vector<1x1x256xf32>
    %27 = vector.shape_cast %26 : vector<1x1x256xf32> to vector<1x256xf32>
    %28 = vector.shape_cast %25 : vector<1x256xf32> to vector<1x1x256xf32>
    tpu.vector_store %arg4[%c1_12, %c0_13, %c0_14], %28 {strides = array<i32>} : memref<4x1x256xf32, #tpu.memory_space<vmem>>, vector<1x1x256xf32>,
    %c2 = arith.constant 2 : index
    %c0_15 = arith.constant 0 : index
    %c0_16 = arith.constant 0 : index
    %29 = vector.load %arg2[%c2, %c0_15, %c0_16] : memref<4x16x256xf32, #tpu.memory_space<vmem>>, vector<1x16x256xf32>
    %30 = vector.shape_cast %29 : vector<1x16x256xf32> to vector<16x256xf32>
    %cst_17 = arith.constant dense<0xFF800000> : vector<256xf32>
    %31 = vector.multi_reduction <maximumf>, %30, %cst_17 [0] : vector<16x256xf32> to vector<256xf32>
    %32 = vector.shape_cast %31 : vector<256xf32> to vector<1x256xf32>
    %33 = vector.broadcast %32 : vector<1x256xf32> to vector<16x256xf32>
    %34 = arith.subf %30, %33 : vector<16x256xf32>
    %35 = math.exp %34 : vector<16x256xf32>
    %cst_18 = arith.constant dense<0.000000e+00> : vector<2x256xf32>
    %36 = tpu.matmul %0, %35, %cst_18 {dimension_numbers = #tpu.dot_dimension_numbers<[1], [0], [0], [1], [0, 0, 1, 1], [], []>, precision = #tpu.contract_precision<fp32>} : vector<2x16xf32>, vector<16x256xf32>, vector<2x256xf32> -> vector<2x256xf32>
    %37 = vector.extract_strided_slice %36 {offsets = [1, 0], sizes = [1, 256], strides = [1, 1]} : vector<2x256xf32> to vector<1x256xf32>
    %38 = vector.extract_strided_slice %36 {offsets = [0, 0], sizes = [1, 256], strides = [1, 1]} : vector<2x256xf32> to vector<1x256xf32>
    %39 = arith.divf %37, %38 : vector<1x256xf32>
    %c2_19 = arith.constant 2 : index
    %c0_20 = arith.constant 0 : index
    %c0_21 = arith.constant 0 : index
    %40 = vector.load %arg4[%c2_19, %c0_20, %c0_21] : memref<4x1x256xf32, #tpu.memory_space<vmem>>, vector<1x1x256xf32>
    %41 = vector.shape_cast %40 : vector<1x1x256xf32> to vector<1x256xf32>
    %42 = vector.shape_cast %39 : vector<1x256xf32> to vector<1x1x256xf32>
    tpu.vector_store %arg4[%c2_19, %c0_20, %c0_21], %42 {strides = array<i32>} : memref<4x1x256xf32, #tpu.memory_space<vmem>>, vector<1x1x256xf32>,
    %c3 = arith.constant 3 : index
    %c0_22 = arith.constant 0 : index
    %c0_23 = arith.constant 0 : index
    %43 = vector.load %arg2[%c3, %c0_22, %c0_23] : memref<4x16x256xf32, #tpu.memory_space<vmem>>, vector<1x16x256xf32>
    %44 = vector.shape_cast %43 : vector<1x16x256xf32> to vector<16x256xf32>
    %cst_24 = arith.constant dense<0xFF800000> : vector<256xf32>
    %45 = vector.multi_reduction <maximumf>, %44, %cst_24 [0] : vector<16x256xf32> to vector<256xf32>
    %46 = vector.shape_cast %45 : vector<256xf32> to vector<1x256xf32>
    %47 = vector.broadcast %46 : vector<1x256xf32> to vector<16x256xf32>
    %48 = arith.subf %44, %47 : vector<16x256xf32>
    %49 = math.exp %48 : vector<16x256xf32>
    %cst_25 = arith.constant dense<0.000000e+00> : vector<2x256xf32>
    %50 = tpu.matmul %0, %49, %cst_25 {dimension_numbers = #tpu.dot_dimension_numbers<[1], [0], [0], [1], [0, 0, 1, 1], [], []>, precision = #tpu.contract_precision<fp32>} : vector<2x16xf32>, vector<16x256xf32>, vector<2x256xf32> -> vector<2x256xf32>
    %51 = vector.extract_strided_slice %50 {offsets = [1, 0], sizes = [1, 256], strides = [1, 1]} : vector<2x256xf32> to vector<1x256xf32>
    %52 = vector.extract_strided_slice %50 {offsets = [0, 0], sizes = [1, 256], strides = [1, 1]} : vector<2x256xf32> to vector<1x256xf32>
    %53 = arith.divf %51, %52 : vector<1x256xf32>
    %c3_26 = arith.constant 3 : index
    %c0_27 = arith.constant 0 : index
    %c0_28 = arith.constant 0 : index
    %54 = vector.load %arg4[%c3_26, %c0_27, %c0_28] : memref<4x1x256xf32, #tpu.memory_space<vmem>>, vector<1x1x256xf32>
    %55 = vector.shape_cast %54 : vector<1x1x256xf32> to vector<1x256xf32>
    %56 = vector.shape_cast %53 : vector<1x256xf32> to vector<1x1x256xf32>
    tpu.vector_store %arg4[%c3_26, %c0_27, %c0_28], %56 {strides = array<i32>} : memref<4x1x256xf32, #tpu.memory_space<vmem>>, vector<1x1x256xf32>,
    return
  }
  func.func @transform_0(%arg0: i32, %arg1: i32) -> (i32, i32, i32) {
    %c0_i32 = arith.constant 0 : i32
    %c0_i32_0 = arith.constant 0 : i32
    return %arg0, %c0_i32, %arg1 : i32, i32, i32
  }
  func.func @transform_1(%arg0: i32, %arg1: i32) -> (i32, i32) {
    %c0_i32 = arith.constant 0 : i32
    %c0_i32_0 = arith.constant 0 : i32
    %c0_i32_1 = arith.constant 0 : i32
    return %c0_i32, %c0_i32_0 : i32, i32
  }
  func.func @transform_2(%arg0: i32, %arg1: i32) -> (i32, i32, i32) {
    %c0_i32 = arith.constant 0 : i32
    %c0_i32_0 = arith.constant 0 : i32
    return %arg0, %c0_i32, %arg1 : i32, i32, i32
  }
}

</mosaic_0001>

<llo_original>
// kernel: disparity_regression.1
$region0: #{disparity_regression.1}
  #allocation0 [shape = 'u32[]', space=smem, size = 0x4, offset = 0x4, fixed_abs, tag = 'smem constant byte address 0x4 - core index']
  #allocation1 [shape = 'u32[72,128]{1,0:T(1,128)}', space=vmem, size = 0x9000, scoped, tag = 'internal scratch']
  %s0 = inlined_call_operand.vmem [shape: f32[8,16,256], index: 0, kind: input, shape index: {}]
  %s1 = inlined_call_operand.vmem [shape: f32[2,16], index: 1, kind: input, shape index: {}]
  %s2 = inlined_call_operand.vmem [shape: f32[8,1,256], index: 2, kind: output, shape index: {}]
  %s3 = sld [smem:[#allocation0]]
  $region41: #{disparity_regression.1} parent=0
    _
  %s5 = ssub.s32 1, %s3
  %s6 = scalar_select 0, %s5, %s3
  loop: start=0, step=1, limit=4
  $region2: #{disparity_regression.1} parent=0 // loop_pre_header
    _
  $region3: #{disparity_regression.1} parent=0 // loop_header
    %s8 = sphi 0, %s12
    %p9 = scmp.ge.s32.totalorder %s8, 4
    %s15 = sphi 0, %s27
    %s16 = sphi 0, %s23
    %s17 = sphi 0, %s15
    %s18 = sphi 0, %s16
    %s19 = sphi 0, %s17
    %s20 = sphi 0, %s18
    %s32 = sphi 0, %s34
    %s35 = sphi 0, %s32
    %s36 = sphi 0, %s35
    %s52 = sphi 0, %s36
    %s56 = sphi 0, %s56
    %s58 = sphi 0, %s56
    %s59 = sphi 0, %s58
    %s73 = sphi 0, %s59
    %s81 = sphi 0, %s83
    %s84 = sphi 0, %s81
    %s85 = sphi 0, %s84
    %s101 = sphi 0, %s85
  $region4: #{disparity_regression.1} parent=0 // loop_header_branch
    %11 = sbr.rel (%p9) target = $region8
  $region5: #{disparity_regression.1} parent=0 // loop_body
    %s13 = ssub.s32 %s8, 1
    %s14 = ssub.s32 %s8, 2
    %s21 = sadd.s32 1, %s16
    %p22 = scmp.ge.s32.totalorder %s21, 1
    %s23 = scalar_select %p22, 0, %s21
    %s24 = sadd.s32 1, %s15
    %s25 = scalar_select %p22, %s24, %s15
    %p26 = scmp.ge.s32.totalorder %s25, 2
    %s27 = scalar_select %p26, 0, %s25
    %s28 = ssub.s32 %s15, %s27
    %s29 = ssub.s32 %s16, %s23
    %s30 = sor.u32 %s28, %s29
    %p31 = scmp.eq.s32.totalorder %s30, 0
    %s33 = sadd.s32 %s32, 1
    %s34 = scalar_select %p31, %s32, %s33
    %p37 = pneg %p31
    %p38 = scmp.eq.s32.totalorder %s8, 1
    %p39 = por %p37, %p38
    %p40 = scmp.ne.s32.totalorder %s32, %s35
    %p41 = scmp.eq.s32.totalorder %s8, 0
    %p42 = por %p40, %p41
    %p43 = scmp.ne.s32.totalorder %s32, %s35
    %p44 = scmp.eq.s32.totalorder %s13, 1
    %p45 = por %p43, %p44
    %p46 = scmp.ne.s32.totalorder %s35, %s36
    %p47 = scmp.eq.s32.totalorder %s13, 0
    %p48 = por %p46, %p47
    %p49 = scmp.ne.s32.totalorder %s35, %s36
    %p50 = scmp.eq.s32.totalorder %s14, 1
    %p51 = por %p49, %p50
    %p53 = scmp.ne.s32.totalorder %s36, %s52
    %p54 = scmp.eq.s32.totalorder %s14, 0
    %p55 = por %p53, %p54
    %s57 = sadd.s32 %s56, 1
    %p60 = scmp.eq.s32.totalorder %s8, 1
    %p61 = scmp.ne.s32.totalorder %s56, %s58
    %p62 = scmp.eq.s32.totalorder %s8, 0
    %p63 = por %p61, %p62
    %p64 = scmp.ne.s32.totalorder %s56, %s58
    %p65 = scmp.eq.s32.totalorder %s13, 1
    %p66 = por %p64, %p65
    %p67 = scmp.ne.s32.totalorder %s58, %s59
    %p68 = scmp.eq.s32.totalorder %s13, 0
    %p69 = por %p67, %p68
    %p70 = scmp.ne.s32.totalorder %s58, %s59
    %p71 = scmp.eq.s32.totalorder %s14, 1
    %p72 = por %p70, %p71
    %p74 = scmp.ne.s32.totalorder %s59, %s73
    %p75 = scmp.eq.s32.totalorder %s14, 0
    %p76 = por %p74, %p75
    %s77 = ssub.s32 %s15, %s27
    %s78 = ssub.s32 %s16, %s23
    %s79 = sor.u32 %s77, %s78
    %p80 = scmp.eq.s32.totalorder %s79, 0
    %s82 = sadd.s32 %s81, 1
    %s83 = scalar_select %p80, %s81, %s82
    %p86 = pneg %p80
    %p87 = scmp.eq.s32.totalorder %s8, 1
    %p88 = por %p86, %p87
    %p89 = scmp.ne.s32.totalorder %s81, %s84
    %p90 = scmp.eq.s32.totalorder %s8, 0
    %p91 = por %p89, %p90
    %p92 = scmp.ne.s32.totalorder %s81, %s84
    %p93 = scmp.eq.s32.totalorder %s13, 1
    %p94 = por %p92, %p93
    %p95 = scmp.ne.s32.totalorder %s84, %s85
    %p96 = scmp.eq.s32.totalorder %s13, 0
    %p97 = por %p95, %p96
    %p98 = scmp.ne.s32.totalorder %s84, %s85
    %p99 = scmp.eq.s32.totalorder %s14, 1
    %p100 = por %p98, %p99
    %p102 = scmp.ne.s32.totalorder %s85, %s101
    %p103 = scmp.eq.s32.totalorder %s14, 0
    %p104 = por %p102, %p103
    %p105 = scmp.le.s32.totalorder 1, %s8
    %p106 = scmp.lt.s32.totalorder %s8, 3
    %p107 = pnand %p105, %p106
    %p108 = pneg %p107
    // Predicated region
    $region9: #{disparity_regression.1} parent=5 // pred_check
      _
    $region10: #{disparity_regression.1} parent=5 // pred_check_branch
      %110 = sbr.rel (%p107) target = $region12
    $region11: #{disparity_regression.1} parent=5 // pred_region
      %s111 = ssub.s32 %s8, 1
      // Predicated region
      $region13: #{disparity_regression.1} parent=11 // pred_check
        %p112 = pneg %p69
      $region14: #{disparity_regression.1} parent=11 // pred_check_branch
        %114 = sbr.rel (%p112) target = $region16
      $region15: #{disparity_regression.1} parent=11 // pred_region
        _
      $region16: #{disparity_regression.1} parent=11 // pred_fallthru
        _
    $region12: #{disparity_regression.1} parent=5 // pred_fallthru
      _
    %p115 = scmp.lt.s32.totalorder %s8, 2
    // Predicated region
    $region17: #{disparity_regression.1} parent=5 // pred_check
      %p116 = pneg %p115
    $region18: #{disparity_regression.1} parent=5 // pred_check_branch
      %118 = sbr.rel (%p116) target = $region20
    $region19: #{disparity_regression.1} parent=5 // pred_region
      // Predicated region
      $region21: #{disparity_regression.1} parent=19 // pred_check
        %p119 = pneg %p42
      $region22: #{disparity_regression.1} parent=19 // pred_check_branch
        %121 = sbr.rel (%p119) target = $region24
      $region23: #{disparity_regression.1} parent=19 // pred_region
        %s122 = smul.u32 4, %s15
        %s123 = smul.u32 2, %s16
        %p124 = scmp.lt.s32.totalorder %s122, 7
        %s125 = scalar_select %p124, %s122, 7
        %p126 = scmp.lt.s32.totalorder %s123, 1
        %s127 = scalar_select %p126, %s123, 1
        %s128 = smul.addr %s125, 4
        %s129 = sadd.s32 %s127, %s128
        %s130 = smul.addr %s129, 8
        %s131 = scalar_lea.vmem %s0, %s130
        %s132 = smul.u32 4, %s15
        %s133 = smul.u32 2, %s16
      $region24: #{disparity_regression.1} parent=19 // pred_fallthru
        _
    $region20: #{disparity_regression.1} parent=5 // pred_fallthru
      _
    %p134 = scmp.le.s32.totalorder 1, %s8
    %p135 = scmp.lt.s32.totalorder %s8, 3
    %p136 = pnand %p134, %p135
    %p137 = pneg %p136
    // Predicated region
    $region25: #{disparity_regression.1} parent=5 // pred_check
      _
    $region26: #{disparity_regression.1} parent=5 // pred_check_branch
      %139 = sbr.rel (%p136) target = $region28
    $region27: #{disparity_regression.1} parent=5 // pred_region
      %s140 = ssub.s32 %s8, 1
      %s141 = smul.u32 4, %s17
      %s142 = smul.u32 2, %s18
      %p143 = scmp.lt.s32.totalorder %s141, 7
      %s144 = scalar_select %p143, %s141, 7
      %p145 = scmp.lt.s32.totalorder %s142, 1
      %s146 = scalar_select %p145, %s142, 1
      %s147 = smul.addr %s144, 4
      %s148 = sadd.s32 %s146, %s147
      %s149 = smul.addr %s148, 8
      %s150 = scalar_lea.vmem %s0, %s149
      %p151 = pneg %p48
      %p152 = pneg %p45
      %p153 = pneg %p69
      %p154 = pneg %p66
      %p155 = pneg %p97
      %p156 = pneg %p94
      %s157 = smul.u32 4, %s17
      %s158 = smul.u32 2, %s18
      %p159 = scmp.lt.s32.totalorder %s157, 7
      %s160 = scalar_select %p159, %s157, 7
      %p161 = scmp.lt.s32.totalorder %s158, 1
      %s162 = scalar_select %p161, %s158, 1
      %s163 = smul.addr %s160, 2
      %s164 = sadd.s32 %s162, %s163
      %s165 = scalar_lea.vmem %s2, %s164
      %s166 = smul.u32 4, %s17
      %s167 = smul.u32 2, %s18
      %p168 = scmp.lt.s32.totalorder %s166, 7
      %s169 = scalar_select %p168, %s166, 7
      %p170 = scmp.lt.s32.totalorder %s167, 1
      %s171 = scalar_select %p170, %s167, 1
      %s172 = smul.addr %s169, 4
      %s173 = sadd.s32 %s171, %s172
      %s174 = smul.addr %s173, 8
      %s175 = scalar_lea.vmem %s0, %s174
      %s176 = smul.u32 4, %s17
      %s177 = smul.u32 2, %s18
      %s178 = smul.u32 4, %s17
      %s179 = smul.u32 2, %s18
      %p180 = scmp.lt.s32.totalorder %s178, 7
      %s181 = scalar_select %p180, %s178, 7
      %p182 = scmp.lt.s32.totalorder %s179, 1
      %s183 = scalar_select %p182, %s179, 1
      %s184 = smul.addr %s181, 2
      %s185 = sadd.s32 %s183, %s184
      %s186 = scalar_lea.vmem %s2, %s185
      %s187 = smul.u32 4, %s17
      %s188 = smul.u32 2, %s18
      %v189 = vld [vmem:[%s1] sm:$0x3]
      %v190 = vld [vmem:[%s175] sm:$0xff]
      %v191 = vld [vmem:[%s175 + $0x8] sm:$0xff]
      %v192 = vld [vmem:[%s175 + $0x10] sm:$0xff]
      %v193 = vld [vmem:[%s175 + $0x18] sm:$0xff]
      %v194 = vmax.f32 %v190, %v192
      %v195 = vrot.slane %v194, 4
      %v196 = vmax.f32 %v194, %v195
      %v197 = vrot.slane %v196, 2
      %v198 = vmax.f32 %v196, %v197
      %v199 = vrot.slane %v198, 1
      %v200 = vmax.f32 %v198, %v199
      %v201 = vmax.f32 %v191, %v193
      %v202 = vrot.slane %v201, 4
      %v203 = vmax.f32 %v201, %v202
      %v204 = vrot.slane %v203, 2
      %v205 = vmax.f32 %v203, %v204
      %v206 = vrot.slane %v205, 1
      %v207 = vmax.f32 %v205, %v206
      %v208 = vsub.f32 %v190, %v200
      %v209 = vsub.f32 %v191, %v207
      %v210 = vsub.f32 %v192, %v200
      %v211 = vsub.f32 %v193, %v207
      %v212 = vmul.f32 %v208, 1.442695
      %v213 = vpow.pop %v212
      %v214 = vmul.f32 %v209, 1.442695
      %v215 = vpow.pop %v214
      %v216 = vmul.f32 %v210, 1.442695
      %v217 = vpow.pop %v216
      %v218 = vmul.f32 %v211, 1.442695
      %v219 = vpow.pop %v218
      %vm220 = vcmask 130048
      %v222 = vsel %vm220, %v189, 0
      %224 = vmatpush.msra.mxu0 0.0
      %225 = vmatpush.msra.mxu0 0.0
      %226 = vmatpush.msra.mxu0 0.0
      %227 = vmatpush.msra.mxu0 0.0
      %228 = vmatpush.msra.mxu0 0.0
      %229 = vmatpush.msra.mxu0 0.0
      %230 = vmatpush.msra.mxu0 0.0
      %231 = vmatpush.msra.mxu0 0.0
      %232 = vmatpush.msra.mxu0 0.0
      %233 = vmatpush.msra.mxu0 0.0
      %234 = vmatpush.msra.mxu0 0.0
      %235 = vmatpush.msra.mxu0 0.0
      %236 = vmatpush.msra.mxu0 0.0
      %237 = vmatpush.msra.mxu0 0.0
      %v238 = vand.u32 %v217, 4294901760
      %239 = vmatpush.msra.mxu0 %v238
      %v240 = vand.u32 %v213, 4294901760
      %241 = vmatpush.msra.mxu0 %v240
      %v242 = vand.u32 %v222, 4294901760
      %v243 = vsub.f32 %v222, %v242
      %v244 = vand.u32 %v243, 4294901760
      %v245 = vsub.f32 %v243, %v244
      %v246 = vand.u32 %v245, 4294901760
      %247 = vmatmul.f32.gmra.mxu0 %v246
      %v248 = vpop.f32.mrf.mxu0
      %v249 = vadd.f32 0.0, %v248
      %250 = vdwg.mxu0
      %251 = vmatpush.msra.mxu0 0.0
      %252 = vmatpush.msra.mxu0 0.0
      %253 = vmatpush.msra.mxu0 0.0
      %254 = vmatpush.msra.mxu0 0.0
      %255 = vmatpush.msra.mxu0 0.0
      %256 = vmatpush.msra.mxu0 0.0
      %257 = vmatpush.msra.mxu0 0.0
      %258 = vmatpush.msra.mxu0 0.0
      %259 = vmatpush.msra.mxu0 0.0
      %260 = vmatpush.msra.mxu0 0.0
      %261 = vmatpush.msra.mxu0 0.0
      %262 = vmatpush.msra.mxu0 0.0
      %263 = vmatpush.msra.mxu0 0.0
      %264 = vmatpush.msra.mxu0 0.0
      %v265 = vand.u32 %v217, 4294901760
      %v266 = vsub.f32 %v217, %v265
      %v267 = vand.u32 %v266, 4294901760
      %v268 = vsub.f32 %v266, %v267
      %v269 = vand.u32 %v268, 4294901760
      %270 = vmatpush.msra.mxu0 %v269
      %v271 = vand.u32 %v213, 4294901760
      %v272 = vsub.f32 %v213, %v271
      %v273 = vand.u32 %v272, 4294901760
      %v274 = vsub.f32 %v272, %v273
      %v275 = vand.u32 %v274, 4294901760
      %276 = vmatpush.msra.mxu0 %v275
      %v277 = vand.u32 %v222, 4294901760
      %278 = vmatmul.f32.gmra.mxu0 %v277
      %v279 = vpop.f32.mrf.mxu0
      %v280 = vadd.f32 %v249, %v279
      %281 = vdwg.mxu0
      %282 = vmatpush.msra.mxu0 0.0
      %283 = vmatpush.msra.mxu0 0.0
      %284 = vmatpush.msra.mxu0 0.0
      %285 = vmatpush.msra.mxu0 0.0
      %286 = vmatpush.msra.mxu0 0.0
      %287 = vmatpush.msra.mxu0 0.0
      %288 = vmatpush.msra.mxu0 0.0
      %289 = vmatpush.msra.mxu0 0.0
      %290 = vmatpush.msra.mxu0 0.0
      %291 = vmatpush.msra.mxu0 0.0
      %292 = vmatpush.msra.mxu0 0.0
      %293 = vmatpush.msra.mxu0 0.0
      %294 = vmatpush.msra.mxu0 0.0
      %295 = vmatpush.msra.mxu0 0.0
      %v296 = vand.u32 %v217, 4294901760
      %v297 = vsub.f32 %v217, %v296
      %298 = vmatpush.msra.mxu0 %v297
      %v299 = vand.u32 %v213, 4294901760
      %v300 = vsub.f32 %v213, %v299
      %301 = vmatpush.msra.mxu0 %v300
      %v302 = vand.u32 %v222, 4294901760
      %v303 = vsub.f32 %v222, %v302
      %304 = vmatmul.f32.gmra.mxu0 %v303
      %v305 = vpop.f32.mrf.mxu0
      %v306 = vadd.f32 %v280, %v305
      %307 = vdwg.mxu0
      %308 = vmatpush.msra.mxu0 0.0
      %309 = vmatpush.msra.mxu0 0.0
      %310 = vmatpush.msra.mxu0 0.0
      %311 = vmatpush.msra.mxu0 0.0
      %312 = vmatpush.msra.mxu0 0.0
      %313 = vmatpush.msra.mxu0 0.0
      %314 = vmatpush.msra.mxu0 0.0
      %315 = vmatpush.msra.mxu0 0.0
      %316 = vmatpush.msra.mxu0 0.0
      %317 = vmatpush.msra.mxu0 0.0
      %318 = vmatpush.msra.mxu0 0.0
      %319 = vmatpush.msra.mxu0 0.0
      %320 = vmatpush.msra.mxu0 0.0
      %321 = vmatpush.msra.mxu0 0.0
      %v322 = vand.u32 %v217, 4294901760
      %323 = vmatpush.msra.mxu0 %v322
      %v324 = vand.u32 %v213, 4294901760
      %325 = vmatpush.msra.mxu0 %v324
      %v326 = vand.u32 %v222, 4294901760
      %v327 = vsub.f32 %v222, %v326
      %v328 = vand.u32 %v327, 4294901760
      %329 = vmatmul.f32.gmra.mxu0 %v328
      %v330 = vpop.f32.mrf.mxu0
      %v331 = vadd.f32 %v306, %v330
      %332 = vdwg.mxu0
      %333 = vmatpush.msra.mxu0 0.0
      %334 = vmatpush.msra.mxu0 0.0
      %335 = vmatpush.msra.mxu0 0.0
      %336 = vmatpush.msra.mxu0 0.0
      %337 = vmatpush.msra.mxu0 0.0
      %338 = vmatpush.msra.mxu0 0.0
      %339 = vmatpush.msra.mxu0 0.0
      %340 = vmatpush.msra.mxu0 0.0
      %341 = vmatpush.msra.mxu0 0.0
      %342 = vmatpush.msra.mxu0 0.0
      %343 = vmatpush.msra.mxu0 0.0
      %344 = vmatpush.msra.mxu0 0.0
      %345 = vmatpush.msra.mxu0 0.0
      %346 = vmatpush.msra.mxu0 0.0
      %v347 = vand.u32 %v217, 4294901760
      %v348 = vsub.f32 %v217, %v347
      %v349 = vand.u32 %v348, 4294901760
      %350 = vmatpush.msra.mxu0 %v349
      %v351 = vand.u32 %v213, 4294901760
      %v352 = vsub.f32 %v213, %v351
      %v353 = vand.u32 %v352, 4294901760
      %354 = vmatpush.msra.mxu0 %v353
      %v355 = vand.u32 %v222, 4294901760
      %356 = vmatmul.f32.gmra.mxu0 %v355
      %v357 = vpop.f32.mrf.mxu0
      %v358 = vadd.f32 %v331, %v357
      %359 = vdwg.mxu0
      %360 = vmatpush.msra.mxu0 0.0
      %361 = vmatpush.msra.mxu0 0.0
      %362 = vmatpush.msra.mxu0 0.0
      %363 = vmatpush.msra.mxu0 0.0
      %364 = vmatpush.msra.mxu0 0.0
      %365 = vmatpush.msra.mxu0 0.0
      %366 = vmatpush.msra.mxu0 0.0
      %367 = vmatpush.msra.mxu0 0.0
      %368 = vmatpush.msra.mxu0 0.0
      %369 = vmatpush.msra.mxu0 0.0
      %370 = vmatpush.msra.mxu0 0.0
      %371 = vmatpush.msra.mxu0 0.0
      %372 = vmatpush.msra.mxu0 0.0
      %373 = vmatpush.msra.mxu0 0.0
      %v374 = vand.u32 %v217, 4294901760
      %375 = vmatpush.msra.mxu0 %v374
      %v376 = vand.u32 %v213, 4294901760
      %377 = vmatpush.msra.mxu0 %v376
      %v378 = vand.u32 %v222, 4294901760
      %379 = vmatmul.f32.gmra.mxu0 %v378
      %v380 = vpop.f32.mrf.mxu0
      %v381 = vadd.f32 %v358, %v380
      %382 = vdwg.mxu0
      %383 = vmatpush.msra.mxu0 0.0
      %384 = vmatpush.msra.mxu0 0.0
      %385 = vmatpush.msra.mxu0 0.0
      %386 = vmatpush.msra.mxu0 0.0
      %387 = vmatpush.msra.mxu0 0.0
      %388 = vmatpush.msra.mxu0 0.0
      %389 = vmatpush.msra.mxu0 0.0
      %390 = vmatpush.msra.mxu0 0.0
      %391 = vmatpush.msra.mxu0 0.0
      %392 = vmatpush.msra.mxu0 0.0
      %393 = vmatpush.msra.mxu0 0.0
      %394 = vmatpush.msra.mxu0 0.0
      %395 = vmatpush.msra.mxu0 0.0
      %396 = vmatpush.msra.mxu0 0.0
      %v397 = vand.u32 %v219, 4294901760
      %398 = vmatpush.msra.mxu0 %v397
      %v399 = vand.u32 %v215, 4294901760
      %400 = vmatpush.msra.mxu0 %v399
      %v401 = vand.u32 %v222, 4294901760
      %v402 = vsub.f32 %v222, %v401
      %v403 = vand.u32 %v402, 4294901760
      %v404 = vsub.f32 %v402, %v403
      %v405 = vand.u32 %v404, 4294901760
      %406 = vmatmul.f32.gmra.mxu0 %v405
      %v407 = vpop.f32.mrf.mxu0
      %v408 = vadd.f32 0.0, %v407
      %409 = vdwg.mxu0
      %410 = vmatpush.msra.mxu0 0.0
      %411 = vmatpush.msra.mxu0 0.0
      %412 = vmatpush.msra.mxu0 0.0
      %413 = vmatpush.msra.mxu0 0.0
      %414 = vmatpush.msra.mxu0 0.0
      %415 = vmatpush.msra.mxu0 0.0
      %416 = vmatpush.msra.mxu0 0.0
      %417 = vmatpush.msra.mxu0 0.0
      %418 = vmatpush.msra.mxu0 0.0
      %419 = vmatpush.msra.mxu0 0.0
      %420 = vmatpush.msra.mxu0 0.0
      %421 = vmatpush.msra.mxu0 0.0
      %422 = vmatpush.msra.mxu0 0.0
      %423 = vmatpush.msra.mxu0 0.0
      %v424 = vand.u32 %v219, 4294901760
      %v425 = vsub.f32 %v219, %v424
      %v426 = vand.u32 %v425, 4294901760
      %v427 = vsub.f32 %v425, %v426
      %v428 = vand.u32 %v427, 4294901760
      %429 = vmatpush.msra.mxu0 %v428
      %v430 = vand.u32 %v215, 4294901760
      %v431 = vsub.f32 %v215, %v430
      %v432 = vand.u32 %v431, 4294901760
      %v433 = vsub.f32 %v431, %v432
      %v434 = vand.u32 %v433, 4294901760
      %435 = vmatpush.msra.mxu0 %v434
      %v436 = vand.u32 %v222, 4294901760
      %437 = vmatmul.f32.gmra.mxu0 %v436
      %v438 = vpop.f32.mrf.mxu0
      %v439 = vadd.f32 %v408, %v438
      %440 = vdwg.mxu0
      %441 = vmatpush.msra.mxu0 0.0
      %442 = vmatpush.msra.mxu0 0.0
      %443 = vmatpush.msra.mxu0 0.0
      %444 = vmatpush.msra.mxu0 0.0
      %445 = vmatpush.msra.mxu0 0.0
      %446 = vmatpush.msra.mxu0 0.0
      %447 = vmatpush.msra.mxu0 0.0
      %448 = vmatpush.msra.mxu0 0.0
      %449 = vmatpush.msra.mxu0 0.0
      %450 = vmatpush.msra.mxu0 0.0
      %451 = vmatpush.msra.mxu0 0.0
      %452 = vmatpush.msra.mxu0 0.0
      %453 = vmatpush.msra.mxu0 0.0
      %454 = vmatpush.msra.mxu0 0.0
      %v455 = vand.u32 %v219, 4294901760
      %v456 = vsub.f32 %v219, %v455
      %457 = vmatpush.msra.mxu0 %v456
      %v458 = vand.u32 %v215, 4294901760
      %v459 = vsub.f32 %v215, %v458
      %460 = vmatpush.msra.mxu0 %v459
      %v461 = vand.u32 %v222, 4294901760
      %v462 = vsub.f32 %v222, %v461
      %463 = vmatmul.f32.gmra.mxu0 %v462
      %v464 = vpop.f32.mrf.mxu0
      %v465 = vadd.f32 %v439, %v464
      %466 = vdwg.mxu0
      %467 = vmatpush.msra.mxu0 0.0
      %468 = vmatpush.msra.mxu0 0.0
      %469 = vmatpush.msra.mxu0 0.0
      %470 = vmatpush.msra.mxu0 0.0
      %471 = vmatpush.msra.mxu0 0.0
      %472 = vmatpush.msra.mxu0 0.0
      %473 = vmatpush.msra.mxu0 0.0
      %474 = vmatpush.msra.mxu0 0.0
      %475 = vmatpush.msra.mxu0 0.0
      %476 = vmatpush.msra.mxu0 0.0
      %477 = vmatpush.msra.mxu0 0.0
      %478 = vmatpush.msra.mxu0 0.0
      %479 = vmatpush.msra.mxu0 0.0
      %480 = vmatpush.msra.mxu0 0.0
      %v481 = vand.u32 %v219, 4294901760
      %482 = vmatpush.msra.mxu0 %v481
      %v483 = vand.u32 %v215, 4294901760
      %484 = vmatpush.msra.mxu0 %v483
      %v485 = vand.u32 %v222, 4294901760
      %v486 = vsub.f32 %v222, %v485
      %v487 = vand.u32 %v486, 4294901760
      %488 = vmatmul.f32.gmra.mxu0 %v487
      %v489 = vpop.f32.mrf.mxu0
      %v490 = vadd.f32 %v465, %v489
      %491 = vdwg.mxu0
      %492 = vmatpush.msra.mxu0 0.0
      %493 = vmatpush.msra.mxu0 0.0
      %494 = vmatpush.msra.mxu0 0.0
      %495 = vmatpush.msra.mxu0 0.0
      %496 = vmatpush.msra.mxu0 0.0
      %497 = vmatpush.msra.mxu0 0.0
      %498 = vmatpush.msra.mxu0 0.0
      %499 = vmatpush.msra.mxu0 0.0
      %500 = vmatpush.msra.mxu0 0.0
      %501 = vmatpush.msra.mxu0 0.0
      %502 = vmatpush.msra.mxu0 0.0
      %503 = vmatpush.msra.mxu0 0.0
      %504 = vmatpush.msra.mxu0 0.0
      %505 = vmatpush.msra.mxu0 0.0
      %v506 = vand.u32 %v219, 4294901760
      %v507 = vsub.f32 %v219, %v506
      %v508 = vand.u32 %v507, 4294901760
      %509 = vmatpush.msra.mxu0 %v508
      %v510 = vand.u32 %v215, 4294901760
      %v511 = vsub.f32 %v215, %v510
      %v512 = vand.u32 %v511, 4294901760
      %513 = vmatpush.msra.mxu0 %v512
      %v514 = vand.u32 %v222, 4294901760
      %515 = vmatmul.f32.gmra.mxu0 %v514
      %v516 = vpop.f32.mrf.mxu0
      %v517 = vadd.f32 %v490, %v516
      %518 = vdwg.mxu0
      %519 = vmatpush.msra.mxu0 0.0
      %520 = vmatpush.msra.mxu0 0.0
      %521 = vmatpush.msra.mxu0 0.0
      %522 = vmatpush.msra.mxu0 0.0
      %523 = vmatpush.msra.mxu0 0.0
      %524 = vmatpush.msra.mxu0 0.0
      %525 = vmatpush.msra.mxu0 0.0
      %526 = vmatpush.msra.mxu0 0.0
      %527 = vmatpush.msra.mxu0 0.0
      %528 = vmatpush.msra.mxu0 0.0
      %529 = vmatpush.msra.mxu0 0.0
      %530 = vmatpush.msra.mxu0 0.0
      %531 = vmatpush.msra.mxu0 0.0
      %532 = vmatpush.msra.mxu0 0.0
      %v533 = vand.u32 %v219, 4294901760
      %534 = vmatpush.msra.mxu0 %v533
      %v535 = vand.u32 %v215, 4294901760
      %536 = vmatpush.msra.mxu0 %v535
      %v537 = vand.u32 %v222, 4294901760
      %538 = vmatmul.f32.gmra.mxu0 %v537
      %v539 = vpop.f32.mrf.mxu0
      %v540 = vadd.f32 %v517, %v539
      %541 = vdwg.mxu0
      %v544 = vrot.slane %v381, 7
      %v545 = vrot.slane %v540, 7
      %v548 = vrcp.pop %v544
      %v549 = vmul.f32 %v544, %v548
      %v550 = vsub.f32 1.0, %v549
      %v551 = vmul.f32 %v548, %v550
      %v552 = vadd.f32 %v548, %v551
      %vm553 = vweird.f32 %v544
      %vm554 = vweird.f32 %v548
      %vm555 = vmor %vm553, %vm554
      %v556 = vsel %vm555, %v548, %v552
      %v557 = vand.u32 2147483647, %v544
      %vm558 = vcmp.eq.f32.partialorder %v557, 8.507059e+37
      %v559 = vand.u32 %v544, 2147483648
      %v560 = vor.u32 1.1754944e-38, %v559
      %v561 = vsel %vm558, %v560, %v556
      %v562 = vmul.f32 %v381, %v561
      %v563 = vrcp.pop %v545
      %v564 = vmul.f32 %v545, %v563
      %v565 = vsub.f32 1.0, %v564
      %v566 = vmul.f32 %v563, %v565
      %v567 = vadd.f32 %v563, %v566
      %vm568 = vweird.f32 %v545
      %vm569 = vweird.f32 %v563
      %vm570 = vmor %vm568, %vm569
      %v571 = vsel %vm570, %v563, %v567
      %v572 = vand.u32 2147483647, %v545
      %vm573 = vcmp.eq.f32.partialorder %v572, 8.507059e+37
      %v574 = vand.u32 %v545, 2147483648
      %v575 = vor.u32 1.1754944e-38, %v574
      %v576 = vsel %vm573, %v575, %v571
      %v577 = vmul.f32 %v540, %v576
      %580 = vst [vmem:[#allocation1] sm:$0xff] %v562
      %581 = vst [vmem:[#allocation1 + $0x9] sm:$0xff] %v577
      %s582 = scalar_lea.vmem [#allocation1], 1
      %v583 = vld [vmem:[%s582] ss:$9 sm:$0xff]
      %v585 = vlaneseq
      %vm586 = vcmp.ge.s32.totalorder %v585, 0
      %vm587 = vcmp.lt.s32.totalorder %v585, 256
      %vm588 = vmand %vm586, %vm587
      %589 = vst.msk [vmem:[%s186] sm:$0x3] %vm588, %v583
      %s590 = scalar_lea.vmem %s175, 32
      %v591 = vld [vmem:[%s590] sm:$0xff]
      %v592 = vld [vmem:[%s590 + $0x8] sm:$0xff]
      %v593 = vld [vmem:[%s590 + $0x10] sm:$0xff]
      %v594 = vld [vmem:[%s590 + $0x18] sm:$0xff]
      %v595 = vmax.f32 %v591, %v593
      %v596 = vrot.slane %v595, 4
      %v597 = vmax.f32 %v595, %v596
      %v598 = vrot.slane %v597, 2
      %v599 = vmax.f32 %v597, %v598
      %v600 = vrot.slane %v599, 1
      %v601 = vmax.f32 %v599, %v600
      %v602 = vmax.f32 %v592, %v594
      %v603 = vrot.slane %v602, 4
      %v604 = vmax.f32 %v602, %v603
      %v605 = vrot.slane %v604, 2
      %v606 = vmax.f32 %v604, %v605
      %v607 = vrot.slane %v606, 1
      %v608 = vmax.f32 %v606, %v607
      %v609 = vsub.f32 %v591, %v601
      %v610 = vsub.f32 %v592, %v608
      %v611 = vsub.f32 %v593, %v601
      %v612 = vsub.f32 %v594, %v608
      %v613 = vmul.f32 %v609, 1.442695
      %v614 = vpow.pop %v613
      %v615 = vmul.f32 %v610, 1.442695
      %v616 = vpow.pop %v615
      %v617 = vmul.f32 %v611, 1.442695
      %v618 = vpow.pop %v617
      %v619 = vmul.f32 %v612, 1.442695
      %v620 = vpow.pop %v619
      %621 = vmatpush.msra.mxu0 0.0
      %622 = vmatpush.msra.mxu0 0.0
      %623 = vmatpush.msra.mxu0 0.0
      %624 = vmatpush.msra.mxu0 0.0
      %625 = vmatpush.msra.mxu0 0.0
      %626 = vmatpush.msra.mxu0 0.0
      %627 = vmatpush.msra.mxu0 0.0
      %628 = vmatpush.msra.mxu0 0.0
      %629 = vmatpush.msra.mxu0 0.0
      %630 = vmatpush.msra.mxu0 0.0
      %631 = vmatpush.msra.mxu0 0.0
      %632 = vmatpush.msra.mxu0 0.0
      %633 = vmatpush.msra.mxu0 0.0
      %634 = vmatpush.msra.mxu0 0.0
      %v635 = vand.u32 %v618, 4294901760
      %636 = vmatpush.msra.mxu0 %v635
      %v637 = vand.u32 %v614, 4294901760
      %638 = vmatpush.msra.mxu0 %v637
      %v639 = vand.u32 %v222, 4294901760
      %v640 = vsub.f32 %v222, %v639
      %v641 = vand.u32 %v640, 4294901760
      %v642 = vsub.f32 %v640, %v641
      %v643 = vand.u32 %v642, 4294901760
      %644 = vmatmul.f32.gmra.mxu0 %v643
      %v645 = vpop.f32.mrf.mxu0
      %v646 = vadd.f32 0.0, %v645
      %647 = vdwg.mxu0
      %648 = vmatpush.msra.mxu0 0.0
      %649 = vmatpush.msra.mxu0 0.0
      %650 = vmatpush.msra.mxu0 0.0
      %651 = vmatpush.msra.mxu0 0.0
      %652 = vmatpush.msra.mxu0 0.0
      %653 = vmatpush.msra.mxu0 0.0
      %654 = vmatpush.msra.mxu0 0.0
      %655 = vmatpush.msra.mxu0 0.0
      %656 = vmatpush.msra.mxu0 0.0
      %657 = vmatpush.msra.mxu0 0.0
      %658 = vmatpush.msra.mxu0 0.0
      %659 = vmatpush.msra.mxu0 0.0
      %660 = vmatpush.msra.mxu0 0.0
      %661 = vmatpush.msra.mxu0 0.0
      %v662 = vand.u32 %v618, 4294901760
      %v663 = vsub.f32 %v618, %v662
      %v664 = vand.u32 %v663, 4294901760
      %v665 = vsub.f32 %v663, %v664
      %v666 = vand.u32 %v665, 4294901760
      %667 = vmatpush.msra.mxu0 %v666
      %v668 = vand.u32 %v614, 4294901760
      %v669 = vsub.f32 %v614, %v668
      %v670 = vand.u32 %v669, 4294901760
      %v671 = vsub.f32 %v669, %v670
      %v672 = vand.u32 %v671, 4294901760
      %673 = vmatpush.msra.mxu0 %v672
      %v674 = vand.u32 %v222, 4294901760
      %675 = vmatmul.f32.gmra.mxu0 %v674
      %v676 = vpop.f32.mrf.mxu0
      %v677 = vadd.f32 %v646, %v676
      %678 = vdwg.mxu0
      %679 = vmatpush.msra.mxu0 0.0
      %680 = vmatpush.msra.mxu0 0.0
      %681 = vmatpush.msra.mxu0 0.0
      %682 = vmatpush.msra.mxu0 0.0
      %683 = vmatpush.msra.mxu0 0.0
      %684 = vmatpush.msra.mxu0 0.0
      %685 = vmatpush.msra.mxu0 0.0
      %686 = vmatpush.msra.mxu0 0.0
      %687 = vmatpush.msra.mxu0 0.0
      %688 = vmatpush.msra.mxu0 0.0
      %689 = vmatpush.msra.mxu0 0.0
      %690 = vmatpush.msra.mxu0 0.0
      %691 = vmatpush.msra.mxu0 0.0
      %692 = vmatpush.msra.mxu0 0.0
      %v693 = vand.u32 %v618, 4294901760
      %v694 = vsub.f32 %v618, %v693
      %695 = vmatpush.msra.mxu0 %v694
      %v696 = vand.u32 %v614, 4294901760
      %v697 = vsub.f32 %v614, %v696
      %698 = vmatpush.msra.mxu0 %v697
      %v699 = vand.u32 %v222, 4294901760
      %v700 = vsub.f32 %v222, %v699
      %701 = vmatmul.f32.gmra.mxu0 %v700
      %v702 = vpop.f32.mrf.mxu0
      %v703 = vadd.f32 %v677, %v702
      %704 = vdwg.mxu0
      %705 = vmatpush.msra.mxu0 0.0
      %706 = vmatpush.msra.mxu0 0.0
      %707 = vmatpush.msra.mxu0 0.0
      %708 = vmatpush.msra.mxu0 0.0
      %709 = vmatpush.msra.mxu0 0.0
      %710 = vmatpush.msra.mxu0 0.0
      %711 = vmatpush.msra.mxu0 0.0
      %712 = vmatpush.msra.mxu0 0.0
      %713 = vmatpush.msra.mxu0 0.0
      %714 = vmatpush.msra.mxu0 0.0
      %715 = vmatpush.msra.mxu0 0.0
      %716 = vmatpush.msra.mxu0 0.0
      %717 = vmatpush.msra.mxu0 0.0
      %718 = vmatpush.msra.mxu0 0.0
      %v719 = vand.u32 %v618, 4294901760
      %720 = vmatpush.msra.mxu0 %v719
      %v721 = vand.u32 %v614, 4294901760
      %722 = vmatpush.msra.mxu0 %v721
      %v723 = vand.u32 %v222, 4294901760
      %v724 = vsub.f32 %v222, %v723
      %v725 = vand.u32 %v724, 4294901760
      %726 = vmatmul.f32.gmra.mxu0 %v725
      %v727 = vpop.f32.mrf.mxu0
      %v728 = vadd.f32 %v703, %v727
      %729 = vdwg.mxu0
      %730 = vmatpush.msra.mxu0 0.0
      %731 = vmatpush.msra.mxu0 0.0
      %732 = vmatpush.msra.mxu0 0.0
      %733 = vmatpush.msra.mxu0 0.0
      %734 = vmatpush.msra.mxu0 0.0
      %735 = vmatpush.msra.mxu0 0.0
      %736 = vmatpush.msra.mxu0 0.0
      %737 = vmatpush.msra.mxu0 0.0
      %738 = vmatpush.msra.mxu0 0.0
      %739 = vmatpush.msra.mxu0 0.0
      %740 = vmatpush.msra.mxu0 0.0
      %741 = vmatpush.msra.mxu0 0.0
      %742 = vmatpush.msra.mxu0 0.0
      %743 = vmatpush.msra.mxu0 0.0
      %v744 = vand.u32 %v618, 4294901760
      %v745 = vsub.f32 %v618, %v744
      %v746 = vand.u32 %v745, 4294901760
      %747 = vmatpush.msra.mxu0 %v746
      %v748 = vand.u32 %v614, 4294901760
      %v749 = vsub.f32 %v614, %v748
      %v750 = vand.u32 %v749, 4294901760
      %751 = vmatpush.msra.mxu0 %v750
      %v752 = vand.u32 %v222, 4294901760
      %753 = vmatmul.f32.gmra.mxu0 %v752
      %v754 = vpop.f32.mrf.mxu0
      %v755 = vadd.f32 %v728, %v754
      %756 = vdwg.mxu0
      %757 = vmatpush.msra.mxu0 0.0
      %758 = vmatpush.msra.mxu0 0.0
      %759 = vmatpush.msra.mxu0 0.0
      %760 = vmatpush.msra.mxu0 0.0
      %761 = vmatpush.msra.mxu0 0.0
      %762 = vmatpush.msra.mxu0 0.0
      %763 = vmatpush.msra.mxu0 0.0
      %764 = vmatpush.msra.mxu0 0.0
      %765 = vmatpush.msra.mxu0 0.0
      %766 = vmatpush.msra.mxu0 0.0
      %767 = vmatpush.msra.mxu0 0.0
      %768 = vmatpush.msra.mxu0 0.0
      %769 = vmatpush.msra.mxu0 0.0
      %770 = vmatpush.msra.mxu0 0.0
      %v771 = vand.u32 %v618, 4294901760
      %772 = vmatpush.msra.mxu0 %v771
      %v773 = vand.u32 %v614, 4294901760
      %774 = vmatpush.msra.mxu0 %v773
      %v775 = vand.u32 %v222, 4294901760
      %776 = vmatmul.f32.gmra.mxu0 %v775
      %v777 = vpop.f32.mrf.mxu0
      %v778 = vadd.f32 %v755, %v777
      %779 = vdwg.mxu0
      %780 = vmatpush.msra.mxu0 0.0
      %781 = vmatpush.msra.mxu0 0.0
      %782 = vmatpush.msra.mxu0 0.0
      %783 = vmatpush.msra.mxu0 0.0
      %784 = vmatpush.msra.mxu0 0.0
      %785 = vmatpush.msra.mxu0 0.0
      %786 = vmatpush.msra.mxu0 0.0
      %787 = vmatpush.msra.mxu0 0.0
      %788 = vmatpush.msra.mxu0 0.0
      %789 = vmatpush.msra.mxu0 0.0
      %790 = vmatpush.msra.mxu0 0.0
      %791 = vmatpush.msra.mxu0 0.0
      %792 = vmatpush.msra.mxu0 0.0
      %793 = vmatpush.msra.mxu0 0.0
      %v794 = vand.u32 %v620, 4294901760
      %795 = vmatpush.msra.mxu0 %v794
      %v796 = vand.u32 %v616, 4294901760
      %797 = vmatpush.msra.mxu0 %v796
      %v798 = vand.u32 %v222, 4294901760
      %v799 = vsub.f32 %v222, %v798
      %v800 = vand.u32 %v799, 4294901760
      %v801 = vsub.f32 %v799, %v800
      %v802 = vand.u32 %v801, 4294901760
      %803 = vmatmul.f32.gmra.mxu0 %v802
      %v804 = vpop.f32.mrf.mxu0
      %v805 = vadd.f32 0.0, %v804
      %806 = vdwg.mxu0
      %807 = vmatpush.msra.mxu0 0.0
      %808 = vmatpush.msra.mxu0 0.0
      %809 = vmatpush.msra.mxu0 0.0
      %810 = vmatpush.msra.mxu0 0.0
      %811 = vmatpush.msra.mxu0 0.0
      %812 = vmatpush.msra.mxu0 0.0
      %813 = vmatpush.msra.mxu0 0.0
      %814 = vmatpush.msra.mxu0 0.0
      %815 = vmatpush.msra.mxu0 0.0
      %816 = vmatpush.msra.mxu0 0.0
      %817 = vmatpush.msra.mxu0 0.0
      %818 = vmatpush.msra.mxu0 0.0
      %819 = vmatpush.msra.mxu0 0.0
      %820 = vmatpush.msra.mxu0 0.0
      %v821 = vand.u32 %v620, 4294901760
      %v822 = vsub.f32 %v620, %v821
      %v823 = vand.u32 %v822, 4294901760
      %v824 = vsub.f32 %v822, %v823
      %v825 = vand.u32 %v824, 4294901760
      %826 = vmatpush.msra.mxu0 %v825
      %v827 = vand.u32 %v616, 4294901760
      %v828 = vsub.f32 %v616, %v827
      %v829 = vand.u32 %v828, 4294901760
      %v830 = vsub.f32 %v828, %v829
      %v831 = vand.u32 %v830, 4294901760
      %832 = vmatpush.msra.mxu0 %v831
      %v833 = vand.u32 %v222, 4294901760
      %834 = vmatmul.f32.gmra.mxu0 %v833
      %v835 = vpop.f32.mrf.mxu0
      %v836 = vadd.f32 %v805, %v835
      %837 = vdwg.mxu0
      %838 = vmatpush.msra.mxu0 0.0
      %839 = vmatpush.msra.mxu0 0.0
      %840 = vmatpush.msra.mxu0 0.0
      %841 = vmatpush.msra.mxu0 0.0
      %842 = vmatpush.msra.mxu0 0.0
      %843 = vmatpush.msra.mxu0 0.0
      %844 = vmatpush.msra.mxu0 0.0
      %845 = vmatpush.msra.mxu0 0.0
      %846 = vmatpush.msra.mxu0 0.0
      %847 = vmatpush.msra.mxu0 0.0
      %848 = vmatpush.msra.mxu0 0.0
      %849 = vmatpush.msra.mxu0 0.0
      %850 = vmatpush.msra.mxu0 0.0
      %851 = vmatpush.msra.mxu0 0.0
      %v852 = vand.u32 %v620, 4294901760
      %v853 = vsub.f32 %v620, %v852
      %854 = vmatpush.msra.mxu0 %v853
      %v855 = vand.u32 %v616, 4294901760
      %v856 = vsub.f32 %v616, %v855
      %857 = vmatpush.msra.mxu0 %v856
      %v858 = vand.u32 %v222, 4294901760
      %v859 = vsub.f32 %v222, %v858
      %860 = vmatmul.f32.gmra.mxu0 %v859
      %v861 = vpop.f32.mrf.mxu0
      %v862 = vadd.f32 %v836, %v861
      %863 = vdwg.mxu0
      %864 = vmatpush.msra.mxu0 0.0
      %865 = vmatpush.msra.mxu0 0.0
      %866 = vmatpush.msra.mxu0 0.0
      %867 = vmatpush.msra.mxu0 0.0
      %868 = vmatpush.msra.mxu0 0.0
      %869 = vmatpush.msra.mxu0 0.0
      %870 = vmatpush.msra.mxu0 0.0
      %871 = vmatpush.msra.mxu0 0.0
      %872 = vmatpush.msra.mxu0 0.0
      %873 = vmatpush.msra.mxu0 0.0
      %874 = vmatpush.msra.mxu0 0.0
      %875 = vmatpush.msra.mxu0 0.0
      %876 = vmatpush.msra.mxu0 0.0
      %877 = vmatpush.msra.mxu0 0.0
      %v878 = vand.u32 %v620, 4294901760
      %879 = vmatpush.msra.mxu0 %v878
      %v880 = vand.u32 %v616, 4294901760
      %881 = vmatpush.msra.mxu0 %v880
      %v882 = vand.u32 %v222, 4294901760
      %v883 = vsub.f32 %v222, %v882
      %v884 = vand.u32 %v883, 4294901760
      %885 = vmatmul.f32.gmra.mxu0 %v884
      %v886 = vpop.f32.mrf.mxu0
      %v887 = vadd.f32 %v862, %v886
      %888 = vdwg.mxu0
      %889 = vmatpush.msra.mxu0 0.0
      %890 = vmatpush.msra.mxu0 0.0
      %891 = vmatpush.msra.mxu0 0.0
      %892 = vmatpush.msra.mxu0 0.0
      %893 = vmatpush.msra.mxu0 0.0
      %894 = vmatpush.msra.mxu0 0.0
      %895 = vmatpush.msra.mxu0 0.0
      %896 = vmatpush.msra.mxu0 0.0
      %897 = vmatpush.msra.mxu0 0.0
      %898 = vmatpush.msra.mxu0 0.0
      %899 = vmatpush.msra.mxu0 0.0
      %900 = vmatpush.msra.mxu0 0.0
      %901 = vmatpush.msra.mxu0 0.0
      %902 = vmatpush.msra.mxu0 0.0
      %v903 = vand.u32 %v620, 4294901760
      %v904 = vsub.f32 %v620, %v903
      %v905 = vand.u32 %v904, 4294901760
      %906 = vmatpush.msra.mxu0 %v905
      %v907 = vand.u32 %v616, 4294901760
      %v908 = vsub.f32 %v616, %v907
      %v909 = vand.u32 %v908, 4294901760
      %910 = vmatpush.msra.mxu0 %v909
      %v911 = vand.u32 %v222, 4294901760
      %912 = vmatmul.f32.gmra.mxu0 %v911
      %v913 = vpop.f32.mrf.mxu0
      %v914 = vadd.f32 %v887, %v913
      %915 = vdwg.mxu0
      %916 = vmatpush.msra.mxu0 0.0
      %917 = vmatpush.msra.mxu0 0.0
      %918 = vmatpush.msra.mxu0 0.0
      %919 = vmatpush.msra.mxu0 0.0
      %920 = vmatpush.msra.mxu0 0.0
      %921 = vmatpush.msra.mxu0 0.0
      %922 = vmatpush.msra.mxu0 0.0
      %923 = vmatpush.msra.mxu0 0.0
      %924 = vmatpush.msra.mxu0 0.0
      %925 = vmatpush.msra.mxu0 0.0
      %926 = vmatpush.msra.mxu0 0.0
      %927 = vmatpush.msra.mxu0 0.0
      %928 = vmatpush.msra.mxu0 0.0
      %929 = vmatpush.msra.mxu0 0.0
      %v930 = vand.u32 %v620, 4294901760
      %931 = vmatpush.msra.mxu0 %v930
      %v932 = vand.u32 %v616, 4294901760
      %933 = vmatpush.msra.mxu0 %v932
      %v934 = vand.u32 %v222, 4294901760
      %935 = vmatmul.f32.gmra.mxu0 %v934
      %v936 = vpop.f32.mrf.mxu0
      %v937 = vadd.f32 %v914, %v936
      %938 = vdwg.mxu0
      %v941 = vrot.slane %v778, 7
      %v942 = vrot.slane %v937, 7
      %v945 = vrcp.pop %v941
      %v946 = vmul.f32 %v941, %v945
      %v947 = vsub.f32 1.0, %v946
      %v948 = vmul.f32 %v945, %v947
      %v949 = vadd.f32 %v945, %v948
      %vm950 = vweird.f32 %v941
      %vm951 = vweird.f32 %v945
      %vm952 = vmor %vm950, %vm951
      %v953 = vsel %vm952, %v945, %v949
      %v954 = vand.u32 2147483647, %v941
      %vm955 = vcmp.eq.f32.partialorder %v954, 8.507059e+37
      %v956 = vand.u32 %v941, 2147483648
      %v957 = vor.u32 1.1754944e-38, %v956
      %v958 = vsel %vm955, %v957, %v953
      %v959 = vmul.f32 %v778, %v958
      %v960 = vrcp.pop %v942
      %v961 = vmul.f32 %v942, %v960
      %v962 = vsub.f32 1.0, %v961
      %v963 = vmul.f32 %v960, %v962
      %v964 = vadd.f32 %v960, %v963
      %vm965 = vweird.f32 %v942
      %vm966 = vweird.f32 %v960
      %vm967 = vmor %vm965, %vm966
      %v968 = vsel %vm967, %v960, %v964
      %v969 = vand.u32 2147483647, %v942
      %vm970 = vcmp.eq.f32.partialorder %v969, 8.507059e+37
      %v971 = vand.u32 %v942, 2147483648
      %v972 = vor.u32 1.1754944e-38, %v971
      %v973 = vsel %vm970, %v972, %v968
      %v974 = vmul.f32 %v937, %v973
      %977 = vst [vmem:[#allocation1] sm:$0xff] %v959
      %978 = vst [vmem:[#allocation1 + $0x9] sm:$0xff] %v974
      %s979 = scalar_lea.vmem [#allocation1], 1
      %v980 = vld [vmem:[%s979] ss:$9 sm:$0xff]
      %s982 = scalar_lea.vmem %s186, 2
      %983 = vst.msk [vmem:[%s982] sm:$0x3] %vm588, %v980
      %s984 = scalar_lea.vmem %s175, 64
      %v985 = vld [vmem:[%s984] sm:$0xff]
      %v986 = vld [vmem:[%s984 + $0x8] sm:$0xff]
      %v987 = vld [vmem:[%s984 + $0x10] sm:$0xff]
      %v988 = vld [vmem:[%s984 + $0x18] sm:$0xff]
      %v989 = vmax.f32 %v985, %v987
      %v990 = vrot.slane %v989, 4
      %v991 = vmax.f32 %v989, %v990
      %v992 = vrot.slane %v991, 2
      %v993 = vmax.f32 %v991, %v992
      %v994 = vrot.slane %v993, 1
      %v995 = vmax.f32 %v993, %v994
      %v996 = vmax.f32 %v986, %v988
      %v997 = vrot.slane %v996, 4
      %v998 = vmax.f32 %v996, %v997
      %v999 = vrot.slane %v998, 2
      %v1000 = vmax.f32 %v998, %v999
      %v1001 = vrot.slane %v1000, 1
      %v1002 = vmax.f32 %v1000, %v1001
      %v1003 = vsub.f32 %v985, %v995
      %v1004 = vsub.f32 %v986, %v1002
      %v1005 = vsub.f32 %v987, %v995
      %v1006 = vsub.f32 %v988, %v1002
      %v1007 = vmul.f32 %v1003, 1.442695
      %v1008 = vpow.pop %v1007
      %v1009 = vmul.f32 %v1004, 1.442695
      %v1010 = vpow.pop %v1009
      %v1011 = vmul.f32 %v1005, 1.442695
      %v1012 = vpow.pop %v1011
      %v1013 = vmul.f32 %v1006, 1.442695
      %v1014 = vpow.pop %v1013
      %1015 = vmatpush.msra.mxu0 0.0
      %1016 = vmatpush.msra.mxu0 0.0
      %1017 = vmatpush.msra.mxu0 0.0
      %1018 = vmatpush.msra.mxu0 0.0
      %1019 = vmatpush.msra.mxu0 0.0
      %1020 = vmatpush.msra.mxu0 0.0
      %1021 = vmatpush.msra.mxu0 0.0
      %1022 = vmatpush.msra.mxu0 0.0
      %1023 = vmatpush.msra.mxu0 0.0
      %1024 = vmatpush.msra.mxu0 0.0
      %1025 = vmatpush.msra.mxu0 0.0
      %1026 = vmatpush.msra.mxu0 0.0
      %1027 = vmatpush.msra.mxu0 0.0
      %1028 = vmatpush.msra.mxu0 0.0
      %v1029 = vand.u32 %v1012, 4294901760
      %1030 = vmatpush.msra.mxu0 %v1029
      %v1031 = vand.u32 %v1008, 4294901760
      %1032 = vmatpush.msra.mxu0 %v1031
      %v1033 = vand.u32 %v222, 4294901760
      %v1034 = vsub.f32 %v222, %v1033
      %v1035 = vand.u32 %v1034, 4294901760
      %v1036 = vsub.f32 %v1034, %v1035
      %v1037 = vand.u32 %v1036, 4294901760
      %1038 = vmatmul.f32.gmra.mxu0 %v1037
      %v1039 = vpop.f32.mrf.mxu0
      %v1040 = vadd.f32 0.0, %v1039
      %1041 = vdwg.mxu0
      %1042 = vmatpush.msra.mxu0 0.0
      %1043 = vmatpush.msra.mxu0 0.0
      %1044 = vmatpush.msra.mxu0 0.0
      %1045 = vmatpush.msra.mxu0 0.0
      %1046 = vmatpush.msra.mxu0 0.0
      %1047 = vmatpush.msra.mxu0 0.0
      %1048 = vmatpush.msra.mxu0 0.0
      %1049 = vmatpush.msra.mxu0 0.0
      %1050 = vmatpush.msra.mxu0 0.0
      %1051 = vmatpush.msra.mxu0 0.0
      %1052 = vmatpush.msra.mxu0 0.0
      %1053 = vmatpush.msra.mxu0 0.0
      %1054 = vmatpush.msra.mxu0 0.0
      %1055 = vmatpush.msra.mxu0 0.0
      %v1056 = vand.u32 %v1012, 4294901760
      %v1057 = vsub.f32 %v1012, %v1056
      %v1058 = vand.u32 %v1057, 4294901760
      %v1059 = vsub.f32 %v1057, %v1058
      %v1060 = vand.u32 %v1059, 4294901760
      %1061 = vmatpush.msra.mxu0 %v1060
      %v1062 = vand.u32 %v1008, 4294901760
      %v1063 = vsub.f32 %v1008, %v1062
      %v1064 = vand.u32 %v1063, 4294901760
      %v1065 = vsub.f32 %v1063, %v1064
      %v1066 = vand.u32 %v1065, 4294901760
      %1067 = vmatpush.msra.mxu0 %v1066
      %v1068 = vand.u32 %v222, 4294901760
      %1069 = vmatmul.f32.gmra.mxu0 %v1068
      %v1070 = vpop.f32.mrf.mxu0
      %v1071 = vadd.f32 %v1040, %v1070
      %1072 = vdwg.mxu0
      %1073 = vmatpush.msra.mxu0 0.0
      %1074 = vmatpush.msra.mxu0 0.0
      %1075 = vmatpush.msra.mxu0 0.0
      %1076 = vmatpush.msra.mxu0 0.0
      %1077 = vmatpush.msra.mxu0 0.0
      %1078 = vmatpush.msra.mxu0 0.0
      %1079 = vmatpush.msra.mxu0 0.0
      %1080 = vmatpush.msra.mxu0 0.0
      %1081 = vmatpush.msra.mxu0 0.0
      %1082 = vmatpush.msra.mxu0 0.0
      %1083 = vmatpush.msra.mxu0 0.0
      %1084 = vmatpush.msra.mxu0 0.0
      %1085 = vmatpush.msra.mxu0 0.0
      %1086 = vmatpush.msra.mxu0 0.0
      %v1087 = vand.u32 %v1012, 4294901760
      %v1088 = vsub.f32 %v1012, %v1087
      %1089 = vmatpush.msra.mxu0 %v1088
      %v1090 = vand.u32 %v1008, 4294901760
      %v1091 = vsub.f32 %v1008, %v1090
      %1092 = vmatpush.msra.mxu0 %v1091
      %v1093 = vand.u32 %v222, 4294901760
      %v1094 = vsub.f32 %v222, %v1093
      %1095 = vmatmul.f32.gmra.mxu0 %v1094
      %v1096 = vpop.f32.mrf.mxu0
      %v1097 = vadd.f32 %v1071, %v1096
      %1098 = vdwg.mxu0
      %1099 = vmatpush.msra.mxu0 0.0
      %1100 = vmatpush.msra.mxu0 0.0
      %1101 = vmatpush.msra.mxu0 0.0
      %1102 = vmatpush.msra.mxu0 0.0
      %1103 = vmatpush.msra.mxu0 0.0
      %1104 = vmatpush.msra.mxu0 0.0
      %1105 = vmatpush.msra.mxu0 0.0
      %1106 = vmatpush.msra.mxu0 0.0
      %1107 = vmatpush.msra.mxu0 0.0
      %1108 = vmatpush.msra.mxu0 0.0
      %1109 = vmatpush.msra.mxu0 0.0
      %1110 = vmatpush.msra.mxu0 0.0
      %1111 = vmatpush.msra.mxu0 0.0
      %1112 = vmatpush.msra.mxu0 0.0
      %v1113 = vand.u32 %v1012, 4294901760
      %1114 = vmatpush.msra.mxu0 %v1113
      %v1115 = vand.u32 %v1008, 4294901760
      %1116 = vmatpush.msra.mxu0 %v1115
      %v1117 = vand.u32 %v222, 4294901760
      %v1118 = vsub.f32 %v222, %v1117
      %v1119 = vand.u32 %v1118, 4294901760
      %1120 = vmatmul.f32.gmra.mxu0 %v1119
      %v1121 = vpop.f32.mrf.mxu0
      %v1122 = vadd.f32 %v1097, %v1121
      %1123 = vdwg.mxu0
      %1124 = vmatpush.msra.mxu0 0.0
      %1125 = vmatpush.msra.mxu0 0.0
      %1126 = vmatpush.msra.mxu0 0.0
      %1127 = vmatpush.msra.mxu0 0.0
      %1128 = vmatpush.msra.mxu0 0.0
      %1129 = vmatpush.msra.mxu0 0.0
      %1130 = vmatpush.msra.mxu0 0.0
      %1131 = vmatpush.msra.mxu0 0.0
      %1132 = vmatpush.msra.mxu0 0.0
      %1133 = vmatpush.msra.mxu0 0.0
      %1134 = vmatpush.msra.mxu0 0.0
      %1135 = vmatpush.msra.mxu0 0.0
      %1136 = vmatpush.msra.mxu0 0.0
      %1137 = vmatpush.msra.mxu0 0.0
      %v1138 = vand.u32 %v1012, 4294901760
      %v1139 = vsub.f32 %v1012, %v1138
      %v1140 = vand.u32 %v1139, 4294901760
      %1141 = vmatpush.msra.mxu0 %v1140
      %v1142 = vand.u32 %v1008, 4294901760
      %v1143 = vsub.f32 %v1008, %v1142
      %v1144 = vand.u32 %v1143, 4294901760
      %1145 = vmatpush.msra.mxu0 %v1144
      %v1146 = vand.u32 %v222, 4294901760
      %1147 = vmatmul.f32.gmra.mxu0 %v1146
      %v1148 = vpop.f32.mrf.mxu0
      %v1149 = vadd.f32 %v1122, %v1148
      %1150 = vdwg.mxu0
      %1151 = vmatpush.msra.mxu0 0.0
      %1152 = vmatpush.msra.mxu0 0.0
      %1153 = vmatpush.msra.mxu0 0.0
      %1154 = vmatpush.msra.mxu0 0.0
      %1155 = vmatpush.msra.mxu0 0.0
      %1156 = vmatpush.msra.mxu0 0.0
      %1157 = vmatpush.msra.mxu0 0.0
      %1158 = vmatpush.msra.mxu0 0.0
      %1159 = vmatpush.msra.mxu0 0.0
      %1160 = vmatpush.msra.mxu0 0.0
      %1161 = vmatpush.msra.mxu0 0.0
      %1162 = vmatpush.msra.mxu0 0.0
      %1163 = vmatpush.msra.mxu0 0.0
      %1164 = vmatpush.msra.mxu0 0.0
      %v1165 = vand.u32 %v1012, 4294901760
      %1166 = vmatpush.msra.mxu0 %v1165
      %v1167 = vand.u32 %v1008, 4294901760
      %1168 = vmatpush.msra.mxu0 %v1167
      %v1169 = vand.u32 %v222, 4294901760
      %1170 = vmatmul.f32.gmra.mxu0 %v1169
      %v1171 = vpop.f32.mrf.mxu0
      %v1172 = vadd.f32 %v1149, %v1171
      %1173 = vdwg.mxu0
      %1174 = vmatpush.msra.mxu0 0.0
      %1175 = vmatpush.msra.mxu0 0.0
      %1176 = vmatpush.msra.mxu0 0.0
      %1177 = vmatpush.msra.mxu0 0.0
      %1178 = vmatpush.msra.mxu0 0.0
      %1179 = vmatpush.msra.mxu0 0.0
      %1180 = vmatpush.msra.mxu0 0.0
      %1181 = vmatpush.msra.mxu0 0.0
      %1182 = vmatpush.msra.mxu0 0.0
      %1183 = vmatpush.msra.mxu0 0.0
      %1184 = vmatpush.msra.mxu0 0.0
      %1185 = vmatpush.msra.mxu0 0.0
      %1186 = vmatpush.msra.mxu0 0.0
      %1187 = vmatpush.msra.mxu0 0.0
      %v1188 = vand.u32 %v1014, 4294901760
      %1189 = vmatpush.msra.mxu0 %v1188
      %v1190 = vand.u32 %v1010, 4294901760
      %1191 = vmatpush.msra.mxu0 %v1190
      %v1192 = vand.u32 %v222, 4294901760
      %v1193 = vsub.f32 %v222, %v1192
      %v1194 = vand.u32 %v1193, 4294901760
      %v1195 = vsub.f32 %v1193, %v1194
      %v1196 = vand.u32 %v1195, 4294901760
      %1197 = vmatmul.f32.gmra.mxu0 %v1196
      %v1198 = vpop.f32.mrf.mxu0
      %v1199 = vadd.f32 0.0, %v1198
      %1200 = vdwg.mxu0
      %1201 = vmatpush.msra.mxu0 0.0
      %1202 = vmatpush.msra.mxu0 0.0
      %1203 = vmatpush.msra.mxu0 0.0
      %1204 = vmatpush.msra.mxu0 0.0
      %1205 = vmatpush.msra.mxu0 0.0
      %1206 = vmatpush.msra.mxu0 0.0
      %1207 = vmatpush.msra.mxu0 0.0
      %1208 = vmatpush.msra.mxu0 0.0
      %1209 = vmatpush.msra.mxu0 0.0
      %1210 = vmatpush.msra.mxu0 0.0
      %1211 = vmatpush.msra.mxu0 0.0
      %1212 = vmatpush.msra.mxu0 0.0
      %1213 = vmatpush.msra.mxu0 0.0
      %1214 = vmatpush.msra.mxu0 0.0
      %v1215 = vand.u32 %v1014, 4294901760
      %v1216 = vsub.f32 %v1014, %v1215
      %v1217 = vand.u32 %v1216, 4294901760
      %v1218 = vsub.f32 %v1216, %v1217
      %v1219 = vand.u32 %v1218, 4294901760
      %1220 = vmatpush.msra.mxu0 %v1219
      %v1221 = vand.u32 %v1010, 4294901760
      %v1222 = vsub.f32 %v1010, %v1221
      %v1223 = vand.u32 %v1222, 4294901760
      %v1224 = vsub.f32 %v1222, %v1223
      %v1225 = vand.u32 %v1224, 4294901760
      %1226 = vmatpush.msra.mxu0 %v1225
      %v1227 = vand.u32 %v222, 4294901760
      %1228 = vmatmul.f32.gmra.mxu0 %v1227
      %v1229 = vpop.f32.mrf.mxu0
      %v1230 = vadd.f32 %v1199, %v1229
      %1231 = vdwg.mxu0
      %1232 = vmatpush.msra.mxu0 0.0
      %1233 = vmatpush.msra.mxu0 0.0
      %1234 = vmatpush.msra.mxu0 0.0
      %1235 = vmatpush.msra.mxu0 0.0
      %1236 = vmatpush.msra.mxu0 0.0
      %1237 = vmatpush.msra.mxu0 0.0
      %1238 = vmatpush.msra.mxu0 0.0
      %1239 = vmatpush.msra.mxu0 0.0
      %1240 = vmatpush.msra.mxu0 0.0
      %1241 = vmatpush.msra.mxu0 0.0
      %1242 = vmatpush.msra.mxu0 0.0
      %1243 = vmatpush.msra.mxu0 0.0
      %1244 = vmatpush.msra.mxu0 0.0
      %1245 = vmatpush.msra.mxu0 0.0
      %v1246 = vand.u32 %v1014, 4294901760
      %v1247 = vsub.f32 %v1014, %v1246
      %1248 = vmatpush.msra.mxu0 %v1247
      %v1249 = vand.u32 %v1010, 4294901760
      %v1250 = vsub.f32 %v1010, %v1249
      %1251 = vmatpush.msra.mxu0 %v1250
      %v1252 = vand.u32 %v222, 4294901760
      %v1253 = vsub.f32 %v222, %v1252
      %1254 = vmatmul.f32.gmra.mxu0 %v1253
      %v1255 = vpop.f32.mrf.mxu0
      %v1256 = vadd.f32 %v1230, %v1255
      %1257 = vdwg.mxu0
      %1258 = vmatpush.msra.mxu0 0.0
      %1259 = vmatpush.msra.mxu0 0.0
      %1260 = vmatpush.msra.mxu0 0.0
      %1261 = vmatpush.msra.mxu0 0.0
      %1262 = vmatpush.msra.mxu0 0.0
      %1263 = vmatpush.msra.mxu0 0.0
      %1264 = vmatpush.msra.mxu0 0.0
      %1265 = vmatpush.msra.mxu0 0.0
      %1266 = vmatpush.msra.mxu0 0.0
      %1267 = vmatpush.msra.mxu0 0.0
      %1268 = vmatpush.msra.mxu0 0.0
      %1269 = vmatpush.msra.mxu0 0.0
      %1270 = vmatpush.msra.mxu0 0.0
      %1271 = vmatpush.msra.mxu0 0.0
      %v1272 = vand.u32 %v1014, 4294901760
      %1273 = vmatpush.msra.mxu0 %v1272
      %v1274 = vand.u32 %v1010, 4294901760
      %1275 = vmatpush.msra.mxu0 %v1274
      %v1276 = vand.u32 %v222, 4294901760
      %v1277 = vsub.f32 %v222, %v1276
      %v1278 = vand.u32 %v1277, 4294901760
      %1279 = vmatmul.f32.gmra.mxu0 %v1278
      %v1280 = vpop.f32.mrf.mxu0
      %v1281 = vadd.f32 %v1256, %v1280
      %1282 = vdwg.mxu0
      %1283 = vmatpush.msra.mxu0 0.0
      %1284 = vmatpush.msra.mxu0 0.0
      %1285 = vmatpush.msra.mxu0 0.0
      %1286 = vmatpush.msra.mxu0 0.0
      %1287 = vmatpush.msra.mxu0 0.0
      %1288 = vmatpush.msra.mxu0 0.0
      %1289 = vmatpush.msra.mxu0 0.0
      %1290 = vmatpush.msra.mxu0 0.0
      %1291 = vmatpush.msra.mxu0 0.0
      %1292 = vmatpush.msra.mxu0 0.0
      %1293 = vmatpush.msra.mxu0 0.0
      %1294 = vmatpush.msra.mxu0 0.0
      %1295 = vmatpush.msra.mxu0 0.0
      %1296 = vmatpush.msra.mxu0 0.0
      %v1297 = vand.u32 %v1014, 4294901760
      %v1298 = vsub.f32 %v1014, %v1297
      %v1299 = vand.u32 %v1298, 4294901760
      %1300 = vmatpush.msra.mxu0 %v1299
      %v1301 = vand.u32 %v1010, 4294901760
      %v1302 = vsub.f32 %v1010, %v1301
      %v1303 = vand.u32 %v1302, 4294901760
      %1304 = vmatpush.msra.mxu0 %v1303
      %v1305 = vand.u32 %v222, 4294901760
      %1306 = vmatmul.f32.gmra.mxu0 %v1305
      %v1307 = vpop.f32.mrf.mxu0
      %v1308 = vadd.f32 %v1281, %v1307
      %1309 = vdwg.mxu0
      %1310 = vmatpush.msra.mxu0 0.0
      %1311 = vmatpush.msra.mxu0 0.0
      %1312 = vmatpush.msra.mxu0 0.0
      %1313 = vmatpush.msra.mxu0 0.0
      %1314 = vmatpush.msra.mxu0 0.0
      %1315 = vmatpush.msra.mxu0 0.0
      %1316 = vmatpush.msra.mxu0 0.0
      %1317 = vmatpush.msra.mxu0 0.0
      %1318 = vmatpush.msra.mxu0 0.0
      %1319 = vmatpush.msra.mxu0 0.0
      %1320 = vmatpush.msra.mxu0 0.0
      %1321 = vmatpush.msra.mxu0 0.0
      %1322 = vmatpush.msra.mxu0 0.0
      %1323 = vmatpush.msra.mxu0 0.0
      %v1324 = vand.u32 %v1014, 4294901760
      %1325 = vmatpush.msra.mxu0 %v1324
      %v1326 = vand.u32 %v1010, 4294901760
      %1327 = vmatpush.msra.mxu0 %v1326
      %v1328 = vand.u32 %v222, 4294901760
      %1329 = vmatmul.f32.gmra.mxu0 %v1328
      %v1330 = vpop.f32.mrf.mxu0
      %v1331 = vadd.f32 %v1308, %v1330
      %1332 = vdwg.mxu0
      %v1335 = vrot.slane %v1172, 7
      %v1336 = vrot.slane %v1331, 7
      %v1339 = vrcp.pop %v1335
      %v1340 = vmul.f32 %v1335, %v1339
      %v1341 = vsub.f32 1.0, %v1340
      %v1342 = vmul.f32 %v1339, %v1341
      %v1343 = vadd.f32 %v1339, %v1342
      %vm1344 = vweird.f32 %v1335
      %vm1345 = vweird.f32 %v1339
      %vm1346 = vmor %vm1344, %vm1345
      %v1347 = vsel %vm1346, %v1339, %v1343
      %v1348 = vand.u32 2147483647, %v1335
      %vm1349 = vcmp.eq.f32.partialorder %v1348, 8.507059e+37
      %v1350 = vand.u32 %v1335, 2147483648
      %v1351 = vor.u32 1.1754944e-38, %v1350
      %v1352 = vsel %vm1349, %v1351, %v1347
      %v1353 = vmul.f32 %v1172, %v1352
      %v1354 = vrcp.pop %v1336
      %v1355 = vmul.f32 %v1336, %v1354
      %v1356 = vsub.f32 1.0, %v1355
      %v1357 = vmul.f32 %v1354, %v1356
      %v1358 = vadd.f32 %v1354, %v1357
      %vm1359 = vweird.f32 %v1336
      %vm1360 = vweird.f32 %v1354
      %vm1361 = vmor %vm1359, %vm1360
      %v1362 = vsel %vm1361, %v1354, %v1358
      %v1363 = vand.u32 2147483647, %v1336
      %vm1364 = vcmp.eq.f32.partialorder %v1363, 8.507059e+37
      %v1365 = vand.u32 %v1336, 2147483648
      %v1366 = vor.u32 1.1754944e-38, %v1365
      %v1367 = vsel %vm1364, %v1366, %v1362
      %v1368 = vmul.f32 %v1331, %v1367
      %1371 = vst [vmem:[#allocation1] sm:$0xff] %v1353
      %1372 = vst [vmem:[#allocation1 + $0x9] sm:$0xff] %v1368
      %s1373 = scalar_lea.vmem [#allocation1], 1
      %v1374 = vld [vmem:[%s1373] ss:$9 sm:$0xff]
      %s1376 = scalar_lea.vmem %s186, 4
      %1377 = vst.msk [vmem:[%s1376] sm:$0x3] %vm588, %v1374
      %s1378 = scalar_lea.vmem %s175, 96
      %v1379 = vld [vmem:[%s1378] sm:$0xff]
      %v1380 = vld [vmem:[%s1378 + $0x8] sm:$0xff]
      %v1381 = vld [vmem:[%s1378 + $0x10] sm:$0xff]
      %v1382 = vld [vmem:[%s1378 + $0x18] sm:$0xff]
      %v1383 = vmax.f32 %v1379, %v1381
      %v1384 = vrot.slane %v1383, 4
      %v1385 = vmax.f32 %v1383, %v1384
      %v1386 = vrot.slane %v1385, 2
      %v1387 = vmax.f32 %v1385, %v1386
      %v1388 = vrot.slane %v1387, 1
      %v1389 = vmax.f32 %v1387, %v1388
      %v1390 = vmax.f32 %v1380, %v1382
      %v1391 = vrot.slane %v1390, 4
      %v1392 = vmax.f32 %v1390, %v1391
      %v1393 = vrot.slane %v1392, 2
      %v1394 = vmax.f32 %v1392, %v1393
      %v1395 = vrot.slane %v1394, 1
      %v1396 = vmax.f32 %v1394, %v1395
      %v1397 = vsub.f32 %v1379, %v1389
      %v1398 = vsub.f32 %v1380, %v1396
      %v1399 = vsub.f32 %v1381, %v1389
      %v1400 = vsub.f32 %v1382, %v1396
      %v1401 = vmul.f32 %v1397, 1.442695
      %v1402 = vpow.pop %v1401
      %v1403 = vmul.f32 %v1398, 1.442695
      %v1404 = vpow.pop %v1403
      %v1405 = vmul.f32 %v1399, 1.442695
      %v1406 = vpow.pop %v1405
      %v1407 = vmul.f32 %v1400, 1.442695
      %v1408 = vpow.pop %v1407
      %1409 = vmatpush.msra.mxu0 0.0
      %1410 = vmatpush.msra.mxu0 0.0
      %1411 = vmatpush.msra.mxu0 0.0
      %1412 = vmatpush.msra.mxu0 0.0
      %1413 = vmatpush.msra.mxu0 0.0
      %1414 = vmatpush.msra.mxu0 0.0
      %1415 = vmatpush.msra.mxu0 0.0
      %1416 = vmatpush.msra.mxu0 0.0
      %1417 = vmatpush.msra.mxu0 0.0
      %1418 = vmatpush.msra.mxu0 0.0
      %1419 = vmatpush.msra.mxu0 0.0
      %1420 = vmatpush.msra.mxu0 0.0
      %1421 = vmatpush.msra.mxu0 0.0
      %1422 = vmatpush.msra.mxu0 0.0
      %v1423 = vand.u32 %v1406, 4294901760
      %1424 = vmatpush.msra.mxu0 %v1423
      %v1425 = vand.u32 %v1402, 4294901760
      %1426 = vmatpush.msra.mxu0 %v1425
      %v1427 = vand.u32 %v222, 4294901760
      %v1428 = vsub.f32 %v222, %v1427
      %v1429 = vand.u32 %v1428, 4294901760
      %v1430 = vsub.f32 %v1428, %v1429
      %v1431 = vand.u32 %v1430, 4294901760
      %1432 = vmatmul.f32.gmra.mxu0 %v1431
      %v1433 = vpop.f32.mrf.mxu0
      %v1434 = vadd.f32 0.0, %v1433
      %1435 = vdwg.mxu0
      %1436 = vmatpush.msra.mxu0 0.0
      %1437 = vmatpush.msra.mxu0 0.0
      %1438 = vmatpush.msra.mxu0 0.0
      %1439 = vmatpush.msra.mxu0 0.0
      %1440 = vmatpush.msra.mxu0 0.0
      %1441 = vmatpush.msra.mxu0 0.0
      %1442 = vmatpush.msra.mxu0 0.0
      %1443 = vmatpush.msra.mxu0 0.0
      %1444 = vmatpush.msra.mxu0 0.0
      %1445 = vmatpush.msra.mxu0 0.0
      %1446 = vmatpush.msra.mxu0 0.0
      %1447 = vmatpush.msra.mxu0 0.0
      %1448 = vmatpush.msra.mxu0 0.0
      %1449 = vmatpush.msra.mxu0 0.0
      %v1450 = vand.u32 %v1406, 4294901760
      %v1451 = vsub.f32 %v1406, %v1450
      %v1452 = vand.u32 %v1451, 4294901760
      %v1453 = vsub.f32 %v1451, %v1452
      %v1454 = vand.u32 %v1453, 4294901760
      %1455 = vmatpush.msra.mxu0 %v1454
      %v1456 = vand.u32 %v1402, 4294901760
      %v1457 = vsub.f32 %v1402, %v1456
      %v1458 = vand.u32 %v1457, 4294901760
      %v1459 = vsub.f32 %v1457, %v1458
      %v1460 = vand.u32 %v1459, 4294901760
      %1461 = vmatpush.msra.mxu0 %v1460
      %v1462 = vand.u32 %v222, 4294901760
      %1463 = vmatmul.f32.gmra.mxu0 %v1462
      %v1464 = vpop.f32.mrf.mxu0
      %v1465 = vadd.f32 %v1434, %v1464
      %1466 = vdwg.mxu0
      %1467 = vmatpush.msra.mxu0 0.0
      %1468 = vmatpush.msra.mxu0 0.0
      %1469 = vmatpush.msra.mxu0 0.0
      %1470 = vmatpush.msra.mxu0 0.0
      %1471 = vmatpush.msra.mxu0 0.0
      %1472 = vmatpush.msra.mxu0 0.0
      %1473 = vmatpush.msra.mxu0 0.0
      %1474 = vmatpush.msra.mxu0 0.0
      %1475 = vmatpush.msra.mxu0 0.0
      %1476 = vmatpush.msra.mxu0 0.0
      %1477 = vmatpush.msra.mxu0 0.0
      %1478 = vmatpush.msra.mxu0 0.0
      %1479 = vmatpush.msra.mxu0 0.0
      %1480 = vmatpush.msra.mxu0 0.0
      %v1481 = vand.u32 %v1406, 4294901760
      %v1482 = vsub.f32 %v1406, %v1481
      %1483 = vmatpush.msra.mxu0 %v1482
      %v1484 = vand.u32 %v1402, 4294901760
      %v1485 = vsub.f32 %v1402, %v1484
      %1486 = vmatpush.msra.mxu0 %v1485
      %v1487 = vand.u32 %v222, 4294901760
      %v1488 = vsub.f32 %v222, %v1487
      %1489 = vmatmul.f32.gmra.mxu0 %v1488
      %v1490 = vpop.f32.mrf.mxu0
      %v1491 = vadd.f32 %v1465, %v1490
      %1492 = vdwg.mxu0
      %1493 = vmatpush.msra.mxu0 0.0
      %1494 = vmatpush.msra.mxu0 0.0
      %1495 = vmatpush.msra.mxu0 0.0
      %1496 = vmatpush.msra.mxu0 0.0
      %1497 = vmatpush.msra.mxu0 0.0
      %1498 = vmatpush.msra.mxu0 0.0
      %1499 = vmatpush.msra.mxu0 0.0
      %1500 = vmatpush.msra.mxu0 0.0
      %1501 = vmatpush.msra.mxu0 0.0
      %1502 = vmatpush.msra.mxu0 0.0
      %1503 = vmatpush.msra.mxu0 0.0
      %1504 = vmatpush.msra.mxu0 0.0
      %1505 = vmatpush.msra.mxu0 0.0
      %1506 = vmatpush.msra.mxu0 0.0
      %v1507 = vand.u32 %v1406, 4294901760
      %1508 = vmatpush.msra.mxu0 %v1507
      %v1509 = vand.u32 %v1402, 4294901760
      %1510 = vmatpush.msra.mxu0 %v1509
      %v1511 = vand.u32 %v222, 4294901760
      %v1512 = vsub.f32 %v222, %v1511
      %v1513 = vand.u32 %v1512, 4294901760
      %1514 = vmatmul.f32.gmra.mxu0 %v1513
      %v1515 = vpop.f32.mrf.mxu0
      %v1516 = vadd.f32 %v1491, %v1515
      %1517 = vdwg.mxu0
      %1518 = vmatpush.msra.mxu0 0.0
      %1519 = vmatpush.msra.mxu0 0.0
      %1520 = vmatpush.msra.mxu0 0.0
      %1521 = vmatpush.msra.mxu0 0.0
      %1522 = vmatpush.msra.mxu0 0.0
      %1523 = vmatpush.msra.mxu0 0.0
      %1524 = vmatpush.msra.mxu0 0.0
      %1525 = vmatpush.msra.mxu0 0.0
      %1526 = vmatpush.msra.mxu0 0.0
      %1527 = vmatpush.msra.mxu0 0.0
      %1528 = vmatpush.msra.mxu0 0.0
      %1529 = vmatpush.msra.mxu0 0.0
      %1530 = vmatpush.msra.mxu0 0.0
      %1531 = vmatpush.msra.mxu0 0.0
      %v1532 = vand.u32 %v1406, 4294901760
      %v1533 = vsub.f32 %v1406, %v1532
      %v1534 = vand.u32 %v1533, 4294901760
      %1535 = vmatpush.msra.mxu0 %v1534
      %v1536 = vand.u32 %v1402, 4294901760
      %v1537 = vsub.f32 %v1402, %v1536
      %v1538 = vand.u32 %v1537, 4294901760
      %1539 = vmatpush.msra.mxu0 %v1538
      %v1540 = vand.u32 %v222, 4294901760
      %1541 = vmatmul.f32.gmra.mxu0 %v1540
      %v1542 = vpop.f32.mrf.mxu0
      %v1543 = vadd.f32 %v1516, %v1542
      %1544 = vdwg.mxu0
      %1545 = vmatpush.msra.mxu0 0.0
      %1546 = vmatpush.msra.mxu0 0.0
      %1547 = vmatpush.msra.mxu0 0.0
      %1548 = vmatpush.msra.mxu0 0.0
      %1549 = vmatpush.msra.mxu0 0.0
      %1550 = vmatpush.msra.mxu0 0.0
      %1551 = vmatpush.msra.mxu0 0.0
      %1552 = vmatpush.msra.mxu0 0.0
      %1553 = vmatpush.msra.mxu0 0.0
      %1554 = vmatpush.msra.mxu0 0.0
      %1555 = vmatpush.msra.mxu0 0.0
      %1556 = vmatpush.msra.mxu0 0.0
      %1557 = vmatpush.msra.mxu0 0.0
      %1558 = vmatpush.msra.mxu0 0.0
      %v1559 = vand.u32 %v1406, 4294901760
      %1560 = vmatpush.msra.mxu0 %v1559
      %v1561 = vand.u32 %v1402, 4294901760
      %1562 = vmatpush.msra.mxu0 %v1561
      %v1563 = vand.u32 %v222, 4294901760
      %1564 = vmatmul.f32.gmra.mxu0 %v1563
      %v1565 = vpop.f32.mrf.mxu0
      %v1566 = vadd.f32 %v1543, %v1565
      %1567 = vdwg.mxu0
      %1568 = vmatpush.msra.mxu0 0.0
      %1569 = vmatpush.msra.mxu0 0.0
      %1570 = vmatpush.msra.mxu0 0.0
      %1571 = vmatpush.msra.mxu0 0.0
      %1572 = vmatpush.msra.mxu0 0.0
      %1573 = vmatpush.msra.mxu0 0.0
      %1574 = vmatpush.msra.mxu0 0.0
      %1575 = vmatpush.msra.mxu0 0.0
      %1576 = vmatpush.msra.mxu0 0.0
      %1577 = vmatpush.msra.mxu0 0.0
      %1578 = vmatpush.msra.mxu0 0.0
      %1579 = vmatpush.msra.mxu0 0.0
      %1580 = vmatpush.msra.mxu0 0.0
      %1581 = vmatpush.msra.mxu0 0.0
      %v1582 = vand.u32 %v1408, 4294901760
      %1583 = vmatpush.msra.mxu0 %v1582
      %v1584 = vand.u32 %v1404, 4294901760
      %1585 = vmatpush.msra.mxu0 %v1584
      %v1586 = vand.u32 %v222, 4294901760
      %v1587 = vsub.f32 %v222, %v1586
      %v1588 = vand.u32 %v1587, 4294901760
      %v1589 = vsub.f32 %v1587, %v1588
      %v1590 = vand.u32 %v1589, 4294901760
      %1591 = vmatmul.f32.gmra.mxu0 %v1590
      %v1592 = vpop.f32.mrf.mxu0
      %v1593 = vadd.f32 0.0, %v1592
      %1594 = vdwg.mxu0
      %1595 = vmatpush.msra.mxu0 0.0
      %1596 = vmatpush.msra.mxu0 0.0
      %1597 = vmatpush.msra.mxu0 0.0
      %1598 = vmatpush.msra.mxu0 0.0
      %1599 = vmatpush.msra.mxu0 0.0
      %1600 = vmatpush.msra.mxu0 0.0
      %1601 = vmatpush.msra.mxu0 0.0
      %1602 = vmatpush.msra.mxu0 0.0
      %1603 = vmatpush.msra.mxu0 0.0
      %1604 = vmatpush.msra.mxu0 0.0
      %1605 = vmatpush.msra.mxu0 0.0
      %1606 = vmatpush.msra.mxu0 0.0
      %1607 = vmatpush.msra.mxu0 0.0
      %1608 = vmatpush.msra.mxu0 0.0
      %v1609 = vand.u32 %v1408, 4294901760
      %v1610 = vsub.f32 %v1408, %v1609
      %v1611 = vand.u32 %v1610, 4294901760
      %v1612 = vsub.f32 %v1610, %v1611
      %v1613 = vand.u32 %v1612, 4294901760
      %1614 = vmatpush.msra.mxu0 %v1613
      %v1615 = vand.u32 %v1404, 4294901760
      %v1616 = vsub.f32 %v1404, %v1615
      %v1617 = vand.u32 %v1616, 4294901760
      %v1618 = vsub.f32 %v1616, %v1617
      %v1619 = vand.u32 %v1618, 4294901760
      %1620 = vmatpush.msra.mxu0 %v1619
      %v1621 = vand.u32 %v222, 4294901760
      %1622 = vmatmul.f32.gmra.mxu0 %v1621
      %v1623 = vpop.f32.mrf.mxu0
      %v1624 = vadd.f32 %v1593, %v1623
      %1625 = vdwg.mxu0
      %1626 = vmatpush.msra.mxu0 0.0
      %1627 = vmatpush.msra.mxu0 0.0
      %1628 = vmatpush.msra.mxu0 0.0
      %1629 = vmatpush.msra.mxu0 0.0
      %1630 = vmatpush.msra.mxu0 0.0
      %1631 = vmatpush.msra.mxu0 0.0
      %1632 = vmatpush.msra.mxu0 0.0
      %1633 = vmatpush.msra.mxu0 0.0
      %1634 = vmatpush.msra.mxu0 0.0
      %1635 = vmatpush.msra.mxu0 0.0
      %1636 = vmatpush.msra.mxu0 0.0
      %1637 = vmatpush.msra.mxu0 0.0
      %1638 = vmatpush.msra.mxu0 0.0
      %1639 = vmatpush.msra.mxu0 0.0
      %v1640 = vand.u32 %v1408, 4294901760
      %v1641 = vsub.f32 %v1408, %v1640
      %1642 = vmatpush.msra.mxu0 %v1641
      %v1643 = vand.u32 %v1404, 4294901760
      %v1644 = vsub.f32 %v1404, %v1643
      %1645 = vmatpush.msra.mxu0 %v1644
      %v1646 = vand.u32 %v222, 4294901760
      %v1647 = vsub.f32 %v222, %v1646
      %1648 = vmatmul.f32.gmra.mxu0 %v1647
      %v1649 = vpop.f32.mrf.mxu0
      %v1650 = vadd.f32 %v1624, %v1649
      %1651 = vdwg.mxu0
      %1652 = vmatpush.msra.mxu0 0.0
      %1653 = vmatpush.msra.mxu0 0.0
      %1654 = vmatpush.msra.mxu0 0.0
      %1655 = vmatpush.msra.mxu0 0.0
      %1656 = vmatpush.msra.mxu0 0.0
      %1657 = vmatpush.msra.mxu0 0.0
      %1658 = vmatpush.msra.mxu0 0.0
      %1659 = vmatpush.msra.mxu0 0.0
      %1660 = vmatpush.msra.mxu0 0.0
      %1661 = vmatpush.msra.mxu0 0.0
      %1662 = vmatpush.msra.mxu0 0.0
      %1663 = vmatpush.msra.mxu0 0.0
      %1664 = vmatpush.msra.mxu0 0.0
      %1665 = vmatpush.msra.mxu0 0.0
      %v1666 = vand.u32 %v1408, 4294901760
      %1667 = vmatpush.msra.mxu0 %v1666
      %v1668 = vand.u32 %v1404, 4294901760
      %1669 = vmatpush.msra.mxu0 %v1668
      %v1670 = vand.u32 %v222, 4294901760
      %v1671 = vsub.f32 %v222, %v1670
      %v1672 = vand.u32 %v1671, 4294901760
      %1673 = vmatmul.f32.gmra.mxu0 %v1672
      %v1674 = vpop.f32.mrf.mxu0
      %v1675 = vadd.f32 %v1650, %v1674
      %1676 = vdwg.mxu0
      %1677 = vmatpush.msra.mxu0 0.0
      %1678 = vmatpush.msra.mxu0 0.0
      %1679 = vmatpush.msra.mxu0 0.0
      %1680 = vmatpush.msra.mxu0 0.0
      %1681 = vmatpush.msra.mxu0 0.0
      %1682 = vmatpush.msra.mxu0 0.0
      %1683 = vmatpush.msra.mxu0 0.0
      %1684 = vmatpush.msra.mxu0 0.0
      %1685 = vmatpush.msra.mxu0 0.0
      %1686 = vmatpush.msra.mxu0 0.0
      %1687 = vmatpush.msra.mxu0 0.0
      %1688 = vmatpush.msra.mxu0 0.0
      %1689 = vmatpush.msra.mxu0 0.0
      %1690 = vmatpush.msra.mxu0 0.0
      %v1691 = vand.u32 %v1408, 4294901760
      %v1692 = vsub.f32 %v1408, %v1691
      %v1693 = vand.u32 %v1692, 4294901760
      %1694 = vmatpush.msra.mxu0 %v1693
      %v1695 = vand.u32 %v1404, 4294901760
      %v1696 = vsub.f32 %v1404, %v1695
      %v1697 = vand.u32 %v1696, 4294901760
      %1698 = vmatpush.msra.mxu0 %v1697
      %v1699 = vand.u32 %v222, 4294901760
      %1700 = vmatmul.f32.gmra.mxu0 %v1699
      %v1701 = vpop.f32.mrf.mxu0
      %v1702 = vadd.f32 %v1675, %v1701
      %1703 = vdwg.mxu0
      %1704 = vmatpush.msra.mxu0 0.0
      %1705 = vmatpush.msra.mxu0 0.0
      %1706 = vmatpush.msra.mxu0 0.0
      %1707 = vmatpush.msra.mxu0 0.0
      %1708 = vmatpush.msra.mxu0 0.0
      %1709 = vmatpush.msra.mxu0 0.0
      %1710 = vmatpush.msra.mxu0 0.0
      %1711 = vmatpush.msra.mxu0 0.0
      %1712 = vmatpush.msra.mxu0 0.0
      %1713 = vmatpush.msra.mxu0 0.0
      %1714 = vmatpush.msra.mxu0 0.0
      %1715 = vmatpush.msra.mxu0 0.0
      %1716 = vmatpush.msra.mxu0 0.0
      %1717 = vmatpush.msra.mxu0 0.0
      %v1718 = vand.u32 %v1408, 4294901760
      %1719 = vmatpush.msra.mxu0 %v1718
      %v1720 = vand.u32 %v1404, 4294901760
      %1721 = vmatpush.msra.mxu0 %v1720
      %v1722 = vand.u32 %v222, 4294901760
      %1723 = vmatmul.f32.gmra.mxu0 %v1722
      %v1724 = vpop.f32.mrf.mxu0
      %v1725 = vadd.f32 %v1702, %v1724
      %1726 = vdwg.mxu0
      %v1729 = vrot.slane %v1566, 7
      %v1730 = vrot.slane %v1725, 7
      %v1733 = vrcp.pop %v1729
      %v1734 = vmul.f32 %v1729, %v1733
      %v1735 = vsub.f32 1.0, %v1734
      %v1736 = vmul.f32 %v1733, %v1735
      %v1737 = vadd.f32 %v1733, %v1736
      %vm1738 = vweird.f32 %v1729
      %vm1739 = vweird.f32 %v1733
      %vm1740 = vmor %vm1738, %vm1739
      %v1741 = vsel %vm1740, %v1733, %v1737
      %v1742 = vand.u32 2147483647, %v1729
      %vm1743 = vcmp.eq.f32.partialorder %v1742, 8.507059e+37
      %v1744 = vand.u32 %v1729, 2147483648
      %v1745 = vor.u32 1.1754944e-38, %v1744
      %v1746 = vsel %vm1743, %v1745, %v1741
      %v1747 = vmul.f32 %v1566, %v1746
      %v1748 = vrcp.pop %v1730
      %v1749 = vmul.f32 %v1730, %v1748
      %v1750 = vsub.f32 1.0, %v1749
      %v1751 = vmul.f32 %v1748, %v1750
      %v1752 = vadd.f32 %v1748, %v1751
      %vm1753 = vweird.f32 %v1730
      %vm1754 = vweird.f32 %v1748
      %vm1755 = vmor %vm1753, %vm1754
      %v1756 = vsel %vm1755, %v1748, %v1752
      %v1757 = vand.u32 2147483647, %v1730
      %vm1758 = vcmp.eq.f32.partialorder %v1757, 8.507059e+37
      %v1759 = vand.u32 %v1730, 2147483648
      %v1760 = vor.u32 1.1754944e-38, %v1759
      %v1761 = vsel %vm1758, %v1760, %v1756
      %v1762 = vmul.f32 %v1725, %v1761
      %1765 = vst [vmem:[#allocation1] sm:$0xff] %v1747
      %1766 = vst [vmem:[#allocation1 + $0x9] sm:$0xff] %v1762
      %s1767 = scalar_lea.vmem [#allocation1], 1
      %v1768 = vld [vmem:[%s1767] ss:$9 sm:$0xff]
      %s1770 = scalar_lea.vmem %s186, 6
      %1771 = vst.msk [vmem:[%s1770] sm:$0x3] %vm588, %v1768
      %s1772 = smul.u32 4, %s17
      %s1773 = smul.u32 2, %s18
      %p1774 = scmp.lt.s32.totalorder %s1772, 7
      %s1775 = scalar_select %p1774, %s1772, 7
      %p1776 = scmp.lt.s32.totalorder %s1773, 1
      %s1777 = scalar_select %p1776, %s1773, 1
      %s1778 = smul.addr %s1775, 2
      %s1779 = sadd.s32 %s1777, %s1778
      %s1780 = scalar_lea.vmem %s2, %s1779
      // Predicated region
      $region29: #{disparity_regression.1} parent=27 // pred_check
        %p1781 = pneg %p94
      $region30: #{disparity_regression.1} parent=27 // pred_check_branch
        %1783 = sbr.rel (%p1781) target = $region32
      $region31: #{disparity_regression.1} parent=27 // pred_region
        %s1784 = smul.u32 4, %s17
        %s1785 = smul.u32 2, %s18
      $region32: #{disparity_regression.1} parent=27 // pred_fallthru
        _
    $region28: #{disparity_regression.1} parent=5 // pred_fallthru
      _
    %p1786 = scmp.le.s32.totalorder 2, %s8
    // Predicated region
    $region33: #{disparity_regression.1} parent=5 // pred_check
      %p1787 = pneg %p1786
    $region34: #{disparity_regression.1} parent=5 // pred_check_branch
      %1789 = sbr.rel (%p1787) target = $region36
    $region35: #{disparity_regression.1} parent=5 // pred_region
      %s1790 = ssub.s32 %s8, 2
      // Predicated region
      $region37: #{disparity_regression.1} parent=35 // pred_check
        %p1791 = pneg %p100
      $region38: #{disparity_regression.1} parent=35 // pred_check_branch
        %1793 = sbr.rel (%p1791) target = $region40
      $region39: #{disparity_regression.1} parent=35 // pred_region
        %s1794 = smul.u32 4, %s19
        %s1795 = smul.u32 2, %s20
        %p1796 = scmp.lt.s32.totalorder %s1794, 7
        %s1797 = scalar_select %p1796, %s1794, 7
        %p1798 = scmp.lt.s32.totalorder %s1795, 1
        %s1799 = scalar_select %p1798, %s1795, 1
        %s1800 = smul.addr %s1797, 2
        %s1801 = sadd.s32 %s1799, %s1800
        %s1802 = scalar_lea.vmem %s2, %s1801
      $region40: #{disparity_regression.1} parent=35 // pred_fallthru
        _
    $region36: #{disparity_regression.1} parent=5 // pred_fallthru
      _
  $region6: #{disparity_regression.1} parent=0 // loop_footer
    %s12 = sadd.s32 1, %s8
  $region7: #{disparity_regression.1} parent=0 // loop_footer_branch
    %7 = sbr.rel target = $region3
  $region8: #{disparity_regression.1} parent=0 // loop_exit
    _

</llo_original>
